<compile_context>
chip_gen: v5e
topology: v5e:2x2
jax: 0.10.0
libtpu: 0.0.40
codegen_flags: <defaults>
</compile_context>

<pallas_src>
import math
from functools import partial

import jax
import jax.numpy as jnp
from jax.experimental import pallas as pl
from jax.experimental.pallas import tpu as pltpu

D_MODEL = 32
NHEAD = 4
SEQ = 8
BATCH = 2
HEAD_DIM = D_MODEL // NHEAD
LN_EPS = 1e-5

# Keep the plain-JAX reference matmuls in full f32 so the hardware comparison is fair.
jax.config.update("jax_default_matmul_precision", "highest")


def _self_attn_kernel(x_ref, pos_ref, w_ref, b_ref, out_ref, *, nhead):
    # x_ref/pos_ref/out_ref: (1, L, E) -- one batch element per grid step.
    # w_ref:                 (E, 4E) = [Wq^T | Wk^T | Wv^T | Wo^T]  (x @ W orientation)
    # b_ref:                 (8, E)  = [bq; bk; bv; bo; ln_w; ln_b; 0; 0]
    _, L, E = x_ref.shape
    hd = E // nhead
    scale = 1.0 / math.sqrt(hd)

    x = x_ref[0]                              # (L, E)  value of tgt for this batch elem
    qk_in = x + pos_ref[0]                    # q = k = tgt + query_pos (v uses tgt only)
    w = w_ref[...]
    b = b_ref[...]

    # Fused q/k in-projection: one MXU matmul produces both q and k.
    qk = jnp.dot(qk_in, w[:, :2 * E], preferred_element_type=jnp.float32)   # (L, 2E)
    q = (qk[:, :E] + b[0:1, :]) * scale
    k = qk[:, E:] + b[1:2, :]
    v = jnp.dot(x, w[:, 2 * E:3 * E], preferred_element_type=jnp.float32) + b[2:3, :]

    # Per-head attention (static unroll), literal transcription of MultiheadAttention.
    head_outs = []
    for h in range(nhead):
        sl = slice(h * hd, (h + 1) * hd)
        q_h = q[:, sl]                        # (L, hd)
        k_h = k[:, sl]                        # (L, hd)
        v_h = v[:, sl]                        # (L, hd)
        s = jax.lax.dot_general(q_h, k_h, (((1,), (1,)), ((), ())),
                                preferred_element_type=jnp.float32)          # (L, L)
        s = s - jnp.max(s, axis=-1, keepdims=True)
        p = jnp.exp(s)
        p = p / jnp.sum(p, axis=-1, keepdims=True)                           # exact softmax
        head_outs.append(jnp.dot(p, v_h, preferred_element_type=jnp.float32))
    attn = jnp.concatenate(head_outs, axis=-1)                               # (L, E)

    # Output projection + residual + LayerNorm.
    y = jnp.dot(attn, w[:, 3 * E:], preferred_element_type=jnp.float32) + b[3:4, :]
    y = x + y
    mu = jnp.mean(y, axis=-1, keepdims=True)
    var = jnp.mean((y - mu) ** 2, axis=-1, keepdims=True)
    y = (y - mu) * jax.lax.rsqrt(var + LN_EPS)
    y = y * b[4:5, :] + b[5:6, :]

    out_ref[0] = y.astype(out_ref.dtype)


@jax.jit
def self_attention_layer(tgt_LNE, query_pos_LNE, params):
    """tgt_LNE, query_pos_LNE: (L, N, E) float32 -- PyTorch MHA convention."""
    L, N, E = tgt_LNE.shape

    # Pack projection weights pre-transposed into `x @ W` orientation; q/k adjacent so
    # the in-projection is a single fused matmul.  Single (E, 4E) operand.
    w = jnp.concatenate([params["wq"].T, params["wk"].T,
                         params["wv"].T, params["wo"].T], axis=1)            # (E, 4E)
    zero = jnp.zeros((E,), jnp.float32)
    b = jnp.stack([params["bq"], params["bk"], params["bv"], params["bo"],
                   params["ln_w"], params["ln_b"], zero, zero], axis=0)      # (8, E)

    # Batch-major layout so each grid step owns a contiguous (L, E) token block.
    x_nle = jnp.transpose(tgt_LNE, (1, 0, 2))        # (N, L, E)
    p_nle = jnp.transpose(query_pos_LNE, (1, 0, 2))  # (N, L, E)

    out = pl.pallas_call(
        partial(_self_attn_kernel, nhead=NHEAD),
        out_shape=jax.ShapeDtypeStruct((N, L, E), tgt_LNE.dtype),
        grid=(N,),
        in_specs=[
            pl.BlockSpec((1, L, E), lambda n: (n, 0, 0)),
            pl.BlockSpec((1, L, E), lambda n: (n, 0, 0)),
            pl.BlockSpec((E, 4 * E), lambda n: (0, 0)),
            pl.BlockSpec((8, E), lambda n: (0, 0)),
        ],
        out_specs=pl.BlockSpec((1, L, E), lambda n: (n, 0, 0)),
        compiler_params=pltpu.CompilerParams(dimension_semantics=("parallel",)),
    )(x_nle, p_nle, w, b)

    return jnp.transpose(out, (1, 0, 2))             # back to (L, N, E)


def _xavier_uniform(key, shape):
    fan_out, fan_in = shape
    limit = math.sqrt(6.0 / (fan_in + fan_out))
    return jax.random.uniform(key, shape, jnp.float32, -limit, limit)


def init_params(key, d_model):
    k_in, k_out = jax.random.split(key)
    # nn.MultiheadAttention: in_proj_weight (3E, E) xavier-uniform (via _reset_parameters),
    # in_proj_bias zeros, out_proj weight xavier, bias zeros.  LayerNorm: ones / zeros.
    in_proj_w = _xavier_uniform(k_in, (3 * d_model, d_model))
    return {
        "wq": in_proj_w[0:d_model],
        "wk": in_proj_w[d_model:2 * d_model],
        "wv": in_proj_w[2 * d_model:3 * d_model],
        "bq": jnp.zeros((d_model,), jnp.float32),
        "bk": jnp.zeros((d_model,), jnp.float32),
        "bv": jnp.zeros((d_model,), jnp.float32),
        "wo": _xavier_uniform(k_out, (d_model, d_model)),
        "bo": jnp.zeros((d_model,), jnp.float32),
        "ln_w": jnp.ones((d_model,), jnp.float32),
        "ln_b": jnp.zeros((d_model,), jnp.float32),
    }


def reference(tgt, pos, p):
    """Plain-JAX reference of forward_post (dropout=0, no masks)."""
    L, N, E = tgt.shape
    qk = tgt + pos
    q = qk @ p["wq"].T + p["bq"]
    k = qk @ p["wk"].T + p["bk"]
    v = tgt @ p["wv"].T + p["bv"]

    def heads(x):  # (L, N, E) -> (N, H, L, Hd)
        return jnp.transpose(x.reshape(L, N, NHEAD, HEAD_DIM), (1, 2, 0, 3))

    qh, kh, vh = heads(q), heads(k), heads(v)
    s = jnp.einsum("nhld,nhmd->nhlm", qh, kh) / math.sqrt(HEAD_DIM)
    a = jax.nn.softmax(s, axis=-1)
    o = jnp.einsum("nhlm,nhmd->nhld", a, vh)
    o = jnp.transpose(o, (2, 0, 1, 3)).reshape(L, N, E)
    o = o @ p["wo"].T + p["bo"]
    res = tgt + o
    mu = res.mean(-1, keepdims=True)
    var = ((res - mu) ** 2).mean(-1, keepdims=True)
    return (res - mu) * jax.lax.rsqrt(var + LN_EPS) * p["ln_w"] + p["ln_b"]


if __name__ == "__main__":
    key = jax.random.PRNGKey(0)
    k_p, k_x, k_pos = jax.random.split(key, 3)

    params = init_params(k_p, D_MODEL)
    tgt = jax.random.normal(k_x, (SEQ, BATCH, D_MODEL), jnp.float32)
    query_pos = jax.random.normal(k_pos, (SEQ, BATCH, D_MODEL), jnp.float32)

    out = self_attention_layer(tgt, query_pos, params)
    out = jax.block_until_ready(out)

    ref = reference(tgt, query_pos, params)
    assert out.shape == (SEQ, BATCH, D_MODEL)
    err = float(jnp.max(jnp.abs(out - ref)))
    assert err < 2e-3, f"mismatch vs JAX reference (max abs err = {err})"

    print("KERNEL_OK")
</pallas_src>

<mosaic_0001>
module attributes {stable_mosaic.version = 11 : i64} {
  func.func @_self_attn_kernel(%arg0: i32, %arg1: memref<1x8x32xf32, #tpu.memory_space<vmem>>, %arg2: memref<1x8x32xf32, #tpu.memory_space<vmem>>, %arg3: memref<32x128xf32, #tpu.memory_space<vmem>>, %arg4: memref<8x32xf32, #tpu.memory_space<vmem>>, %arg5: memref<1x8x32xf32, #tpu.memory_space<vmem>>) attributes {dimension_semantics = [#tpu.dimension_semantics<parallel>], iteration_bounds = array<i64: 2>, scalar_prefetch = 0 : i64, scratch_operands = 0 : i64, tpu.core_type = #tpu.core_type<tc>, window_params = [{transform_indices = @transform_0, window_bounds = array<i64: 1, 8, 32>}, {transform_indices = @transform_1, window_bounds = array<i64: 1, 8, 32>}, {pipeline_mode = #tpu.pipeline_mode<synchronous>, transform_indices = @transform_2, window_bounds = array<i64: 32, 128>}, {pipeline_mode = #tpu.pipeline_mode<synchronous>, transform_indices = @transform_3, window_bounds = array<i64: 8, 32>}, {transform_indices = @transform_4, window_bounds = array<i64: 1, 8, 32>}]} {
    %c0 = arith.constant 0 : index
    %c0_0 = arith.constant 0 : index
    %c0_1 = arith.constant 0 : index
    %0 = vector.load %arg1[%c0, %c0_0, %c0_1] : memref<1x8x32xf32, #tpu.memory_space<vmem>>, vector<1x8x32xf32>
    %1 = vector.shape_cast %0 : vector<1x8x32xf32> to vector<8x32xf32>
    %c0_2 = arith.constant 0 : index
    %c0_3 = arith.constant 0 : index
    %c0_4 = arith.constant 0 : index
    %2 = vector.load %arg2[%c0_2, %c0_3, %c0_4] : memref<1x8x32xf32, #tpu.memory_space<vmem>>, vector<1x8x32xf32>
    %3 = vector.shape_cast %2 : vector<1x8x32xf32> to vector<8x32xf32>
    %4 = arith.addf %1, %3 : vector<8x32xf32>
    %c0_5 = arith.constant 0 : index
    %c0_6 = arith.constant 0 : index
    %5 = vector.load %arg3[%c0_5, %c0_6] : memref<32x128xf32, #tpu.memory_space<vmem>>, vector<32x128xf32>
    %c0_7 = arith.constant 0 : index
    %c0_8 = arith.constant 0 : index
    %6 = vector.load %arg4[%c0_7, %c0_8] : memref<8x32xf32, #tpu.memory_space<vmem>>, vector<8x32xf32>
    %7 = vector.extract_strided_slice %5 {offsets = [0, 0], sizes = [32, 64], strides = [1, 1]} : vector<32x128xf32> to vector<32x64xf32>
    %cst = arith.constant dense<0.000000e+00> : vector<8x64xf32>
    %8 = tpu.matmul %4, %7, %cst {dimension_numbers = #tpu.dot_dimension_numbers<[1], [0], [0], [1], [0, 0, 1, 1], [], []>, precision = #tpu.contract_precision<fp32>} : vector<8x32xf32>, vector<32x64xf32>, vector<8x64xf32> -> vector<8x64xf32>
    %9 = vector.extract_strided_slice %8 {offsets = [0, 0], sizes = [8, 32], strides = [1, 1]} : vector<8x64xf32> to vector<8x32xf32>
    %10 = vector.extract_strided_slice %6 {offsets = [0, 0], sizes = [1, 32], strides = [1, 1]} : vector<8x32xf32> to vector<1x32xf32>
    %11 = vector.broadcast %10 : vector<1x32xf32> to vector<8x32xf32>
    %12 = arith.addf %9, %11 : vector<8x32xf32>
    %cst_9 = arith.constant 0.353553385 : f32
    %13 = vector.broadcast %cst_9 : f32 to vector<8x32xf32>
    %14 = arith.mulf %12, %13 : vector<8x32xf32>
    %15 = vector.extract_strided_slice %8 {offsets = [0, 32], sizes = [8, 32], strides = [1, 1]} : vector<8x64xf32> to vector<8x32xf32>
    %16 = vector.extract_strided_slice %6 {offsets = [1, 0], sizes = [1, 32], strides = [1, 1]} : vector<8x32xf32> to vector<1x32xf32>
    %17 = vector.broadcast %16 : vector<1x32xf32> to vector<8x32xf32>
    %18 = arith.addf %15, %17 : vector<8x32xf32>
    %19 = vector.extract_strided_slice %5 {offsets = [0, 64], sizes = [32, 32], strides = [1, 1]} : vector<32x128xf32> to vector<32x32xf32>
    %cst_10 = arith.constant dense<0.000000e+00> : vector<8x32xf32>
    %20 = tpu.matmul %1, %19, %cst_10 {dimension_numbers = #tpu.dot_dimension_numbers<[1], [0], [0], [1], [0, 0, 1, 1], [], []>, precision = #tpu.contract_precision<fp32>} : vector<8x32xf32>, vector<32x32xf32>, vector<8x32xf32> -> vector<8x32xf32>
    %21 = vector.extract_strided_slice %6 {offsets = [2, 0], sizes = [1, 32], strides = [1, 1]} : vector<8x32xf32> to vector<1x32xf32>
    %22 = vector.broadcast %21 : vector<1x32xf32> to vector<8x32xf32>
    %23 = arith.addf %20, %22 : vector<8x32xf32>
    %24 = vector.extract_strided_slice %14 {offsets = [0, 0], sizes = [8, 8], strides = [1, 1]} : vector<8x32xf32> to vector<8x8xf32>
    %25 = vector.extract_strided_slice %18 {offsets = [0, 0], sizes = [8, 8], strides = [1, 1]} : vector<8x32xf32> to vector<8x8xf32>
    %26 = vector.extract_strided_slice %23 {offsets = [0, 0], sizes = [8, 8], strides = [1, 1]} : vector<8x32xf32> to vector<8x8xf32>
    %cst_11 = arith.constant dense<0.000000e+00> : vector<8x8xf32>
    %27 = tpu.matmul %24, %25, %cst_11 {dimension_numbers = #tpu.dot_dimension_numbers<[1], [1], [0], [0], [0, 0, 1, 0], [], []>, precision = #tpu.contract_precision<fp32>} : vector<8x8xf32>, vector<8x8xf32>, vector<8x8xf32> -> vector<8x8xf32>
    %cst_12 = arith.constant dense<0xFF800000> : vector<8xf32>
    %28 = vector.multi_reduction <maximumf>, %27, %cst_12 [1] : vector<8x8xf32> to vector<8xf32>
    %29 = vector.shape_cast %28 : vector<8xf32> to vector<8x1xf32>
    %30 = vector.broadcast %29 : vector<8x1xf32> to vector<8x8xf32>
    %31 = arith.subf %27, %30 : vector<8x8xf32>
    %32 = math.exp %31 : vector<8x8xf32>
    %cst_13 = arith.constant dense<0.000000e+00> : vector<8xf32>
    %33 = vector.multi_reduction <add>, %32, %cst_13 [1] : vector<8x8xf32> to vector<8xf32>
    %34 = vector.shape_cast %33 : vector<8xf32> to vector<8x1xf32>
    %35 = vector.broadcast %34 : vector<8x1xf32> to vector<8x8xf32>
    %36 = arith.divf %32, %35 : vector<8x8xf32>
    %cst_14 = arith.constant dense<0.000000e+00> : vector<8x8xf32>
    %37 = tpu.matmul %36, %26, %cst_14 {dimension_numbers = #tpu.dot_dimension_numbers<[1], [0], [0], [1], [0, 0, 1, 1], [], []>, precision = #tpu.contract_precision<fp32>} : vector<8x8xf32>, vector<8x8xf32>, vector<8x8xf32> -> vector<8x8xf32>
    %38 = vector.extract_strided_slice %14 {offsets = [0, 8], sizes = [8, 8], strides = [1, 1]} : vector<8x32xf32> to vector<8x8xf32>
    %39 = vector.extract_strided_slice %18 {offsets = [0, 8], sizes = [8, 8], strides = [1, 1]} : vector<8x32xf32> to vector<8x8xf32>
    %40 = vector.extract_strided_slice %23 {offsets = [0, 8], sizes = [8, 8], strides = [1, 1]} : vector<8x32xf32> to vector<8x8xf32>
    %cst_15 = arith.constant dense<0.000000e+00> : vector<8x8xf32>
    %41 = tpu.matmul %38, %39, %cst_15 {dimension_numbers = #tpu.dot_dimension_numbers<[1], [1], [0], [0], [0, 0, 1, 0], [], []>, precision = #tpu.contract_precision<fp32>} : vector<8x8xf32>, vector<8x8xf32>, vector<8x8xf32> -> vector<8x8xf32>
    %cst_16 = arith.constant dense<0xFF800000> : vector<8xf32>
    %42 = vector.multi_reduction <maximumf>, %41, %cst_16 [1] : vector<8x8xf32> to vector<8xf32>
    %43 = vector.shape_cast %42 : vector<8xf32> to vector<8x1xf32>
    %44 = vector.broadcast %43 : vector<8x1xf32> to vector<8x8xf32>
    %45 = arith.subf %41, %44 : vector<8x8xf32>
    %46 = math.exp %45 : vector<8x8xf32>
    %cst_17 = arith.constant dense<0.000000e+00> : vector<8xf32>
    %47 = vector.multi_reduction <add>, %46, %cst_17 [1] : vector<8x8xf32> to vector<8xf32>
    %48 = vector.shape_cast %47 : vector<8xf32> to vector<8x1xf32>
    %49 = vector.broadcast %48 : vector<8x1xf32> to vector<8x8xf32>
    %50 = arith.divf %46, %49 : vector<8x8xf32>
    %cst_18 = arith.constant dense<0.000000e+00> : vector<8x8xf32>
    %51 = tpu.matmul %50, %40, %cst_18 {dimension_numbers = #tpu.dot_dimension_numbers<[1], [0], [0], [1], [0, 0, 1, 1], [], []>, precision = #tpu.contract_precision<fp32>} : vector<8x8xf32>, vector<8x8xf32>, vector<8x8xf32> -> vector<8x8xf32>
    %52 = vector.extract_strided_slice %14 {offsets = [0, 16], sizes = [8, 8], strides = [1, 1]} : vector<8x32xf32> to vector<8x8xf32>
    %53 = vector.extract_strided_slice %18 {offsets = [0, 16], sizes = [8, 8], strides = [1, 1]} : vector<8x32xf32> to vector<8x8xf32>
    %54 = vector.extract_strided_slice %23 {offsets = [0, 16], sizes = [8, 8], strides = [1, 1]} : vector<8x32xf32> to vector<8x8xf32>
    %cst_19 = arith.constant dense<0.000000e+00> : vector<8x8xf32>
    %55 = tpu.matmul %52, %53, %cst_19 {dimension_numbers = #tpu.dot_dimension_numbers<[1], [1], [0], [0], [0, 0, 1, 0], [], []>, precision = #tpu.contract_precision<fp32>} : vector<8x8xf32>, vector<8x8xf32>, vector<8x8xf32> -> vector<8x8xf32>
    %cst_20 = arith.constant dense<0xFF800000> : vector<8xf32>
    %56 = vector.multi_reduction <maximumf>, %55, %cst_20 [1] : vector<8x8xf32> to vector<8xf32>
    %57 = vector.shape_cast %56 : vector<8xf32> to vector<8x1xf32>
    %58 = vector.broadcast %57 : vector<8x1xf32> to vector<8x8xf32>
    %59 = arith.subf %55, %58 : vector<8x8xf32>
    %60 = math.exp %59 : vector<8x8xf32>
    %cst_21 = arith.constant dense<0.000000e+00> : vector<8xf32>
    %61 = vector.multi_reduction <add>, %60, %cst_21 [1] : vector<8x8xf32> to vector<8xf32>
    %62 = vector.shape_cast %61 : vector<8xf32> to vector<8x1xf32>
    %63 = vector.broadcast %62 : vector<8x1xf32> to vector<8x8xf32>
    %64 = arith.divf %60, %63 : vector<8x8xf32>
    %cst_22 = arith.constant dense<0.000000e+00> : vector<8x8xf32>
    %65 = tpu.matmul %64, %54, %cst_22 {dimension_numbers = #tpu.dot_dimension_numbers<[1], [0], [0], [1], [0, 0, 1, 1], [], []>, precision = #tpu.contract_precision<fp32>} : vector<8x8xf32>, vector<8x8xf32>, vector<8x8xf32> -> vector<8x8xf32>
    %66 = vector.extract_strided_slice %14 {offsets = [0, 24], sizes = [8, 8], strides = [1, 1]} : vector<8x32xf32> to vector<8x8xf32>
    %67 = vector.extract_strided_slice %18 {offsets = [0, 24], sizes = [8, 8], strides = [1, 1]} : vector<8x32xf32> to vector<8x8xf32>
    %68 = vector.extract_strided_slice %23 {offsets = [0, 24], sizes = [8, 8], strides = [1, 1]} : vector<8x32xf32> to vector<8x8xf32>
    %cst_23 = arith.constant dense<0.000000e+00> : vector<8x8xf32>
    %69 = tpu.matmul %66, %67, %cst_23 {dimension_numbers = #tpu.dot_dimension_numbers<[1], [1], [0], [0], [0, 0, 1, 0], [], []>, precision = #tpu.contract_precision<fp32>} : vector<8x8xf32>, vector<8x8xf32>, vector<8x8xf32> -> vector<8x8xf32>
    %cst_24 = arith.constant dense<0xFF800000> : vector<8xf32>
    %70 = vector.multi_reduction <maximumf>, %69, %cst_24 [1] : vector<8x8xf32> to vector<8xf32>
    %71 = vector.shape_cast %70 : vector<8xf32> to vector<8x1xf32>
    %72 = vector.broadcast %71 : vector<8x1xf32> to vector<8x8xf32>
    %73 = arith.subf %69, %72 : vector<8x8xf32>
    %74 = math.exp %73 : vector<8x8xf32>
    %cst_25 = arith.constant dense<0.000000e+00> : vector<8xf32>
    %75 = vector.multi_reduction <add>, %74, %cst_25 [1] : vector<8x8xf32> to vector<8xf32>
    %76 = vector.shape_cast %75 : vector<8xf32> to vector<8x1xf32>
    %77 = vector.broadcast %76 : vector<8x1xf32> to vector<8x8xf32>
    %78 = arith.divf %74, %77 : vector<8x8xf32>
    %cst_26 = arith.constant dense<0.000000e+00> : vector<8x8xf32>
    %79 = tpu.matmul %78, %68, %cst_26 {dimension_numbers = #tpu.dot_dimension_numbers<[1], [0], [0], [1], [0, 0, 1, 1], [], []>, precision = #tpu.contract_precision<fp32>} : vector<8x8xf32>, vector<8x8xf32>, vector<8x8xf32> -> vector<8x8xf32>
    %80 = tpu.concatenate %37, %51, %65, %79 in 1 : vector<8x8xf32>, vector<8x8xf32>, vector<8x8xf32>, vector<8x8xf32> -> vector<8x32xf32>
    %81 = vector.extract_strided_slice %5 {offsets = [0, 96], sizes = [32, 32], strides = [1, 1]} : vector<32x128xf32> to vector<32x32xf32>
    %cst_27 = arith.constant dense<0.000000e+00> : vector<8x32xf32>
    %82 = tpu.matmul %80, %81, %cst_27 {dimension_numbers = #tpu.dot_dimension_numbers<[1], [0], [0], [1], [0, 0, 1, 1], [], []>, precision = #tpu.contract_precision<fp32>} : vector<8x32xf32>, vector<32x32xf32>, vector<8x32xf32> -> vector<8x32xf32>
    %83 = vector.extract_strided_slice %6 {offsets = [3, 0], sizes = [1, 32], strides = [1, 1]} : vector<8x32xf32> to vector<1x32xf32>
    %84 = vector.broadcast %83 : vector<1x32xf32> to vector<8x32xf32>
    %85 = arith.addf %82, %84 : vector<8x32xf32>
    %86 = arith.addf %1, %85 : vector<8x32xf32>
    %cst_28 = arith.constant dense<0.000000e+00> : vector<8xf32>
    %87 = vector.multi_reduction <add>, %86, %cst_28 [1] : vector<8x32xf32> to vector<8xf32>
    %88 = vector.shape_cast %87 : vector<8xf32> to vector<8x1xf32>
    %cst_29 = arith.constant 3.200000e+01 : f32
    %89 = vector.broadcast %cst_29 : f32 to vector<8x1xf32>
    %90 = arith.divf %88, %89 : vector<8x1xf32>
    %91 = vector.broadcast %90 : vector<8x1xf32> to vector<8x32xf32>
    %92 = arith.subf %86, %91 : vector<8x32xf32>
    %93 = arith.mulf %92, %92 : vector<8x32xf32>
    %cst_30 = arith.constant dense<0.000000e+00> : vector<8xf32>
    %94 = vector.multi_reduction <add>, %93, %cst_30 [1] : vector<8x32xf32> to vector<8xf32>
    %95 = vector.shape_cast %94 : vector<8xf32> to vector<8x1xf32>
    %cst_31 = arith.constant 3.200000e+01 : f32
    %96 = vector.broadcast %cst_31 : f32 to vector<8x1xf32>
    %97 = arith.divf %95, %96 : vector<8x1xf32>
    %98 = vector.broadcast %90 : vector<8x1xf32> to vector<8x32xf32>
    %99 = arith.subf %86, %98 : vector<8x32xf32>
    %cst_32 = arith.constant 9.99999974E-6 : f32
    %100 = vector.broadcast %cst_32 : f32 to vector<8x1xf32>
    %101 = arith.addf %97, %100 : vector<8x1xf32>
    %102 = math.rsqrt %101 : vector<8x1xf32>
    %103 = vector.broadcast %102 : vector<8x1xf32> to vector<8x32xf32>
    %104 = arith.mulf %99, %103 : vector<8x32xf32>
    %105 = vector.extract_strided_slice %6 {offsets = [4, 0], sizes = [1, 32], strides = [1, 1]} : vector<8x32xf32> to vector<1x32xf32>
    %106 = vector.broadcast %105 : vector<1x32xf32> to vector<8x32xf32>
    %107 = arith.mulf %104, %106 : vector<8x32xf32>
    %108 = vector.extract_strided_slice %6 {offsets = [5, 0], sizes = [1, 32], strides = [1, 1]} : vector<8x32xf32> to vector<1x32xf32>
    %109 = vector.broadcast %108 : vector<1x32xf32> to vector<8x32xf32>
    %110 = arith.addf %107, %109 : vector<8x32xf32>
    %c0_33 = arith.constant 0 : index
    %c0_34 = arith.constant 0 : index
    %c0_35 = arith.constant 0 : index
    %111 = vector.load %arg5[%c0_33, %c0_34, %c0_35] : memref<1x8x32xf32, #tpu.memory_space<vmem>>, vector<1x8x32xf32>
    %112 = vector.shape_cast %111 : vector<1x8x32xf32> to vector<8x32xf32>
    %113 = vector.shape_cast %110 : vector<8x32xf32> to vector<1x8x32xf32>
    tpu.vector_store %arg5[%c0_33, %c0_34, %c0_35], %113 {strides = array<i32>} : memref<1x8x32xf32, #tpu.memory_space<vmem>>, vector<1x8x32xf32>,
    return
  }
  func.func @transform_0(%arg0: i32) -> (i32, i32, i32) {
    %c0_i32 = arith.constant 0 : i32
    %c0_i32_0 = arith.constant 0 : i32
    %c0_i32_1 = arith.constant 0 : i32
    return %arg0, %c0_i32, %c0_i32_0 : i32, i32, i32
  }
  func.func @transform_1(%arg0: i32) -> (i32, i32, i32) {
    %c0_i32 = arith.constant 0 : i32
    %c0_i32_0 = arith.constant 0 : i32
    %c0_i32_1 = arith.constant 0 : i32
    return %arg0, %c0_i32, %c0_i32_0 : i32, i32, i32
  }
  func.func @transform_2(%arg0: i32) -> (i32, i32) {
    %c0_i32 = arith.constant 0 : i32
    %c0_i32_0 = arith.constant 0 : i32
    %c0_i32_1 = arith.constant 0 : i32
    return %c0_i32, %c0_i32_0 : i32, i32
  }
  func.func @transform_3(%arg0: i32) -> (i32, i32) {
    %c0_i32 = arith.constant 0 : i32
    %c0_i32_0 = arith.constant 0 : i32
    %c0_i32_1 = arith.constant 0 : i32
    return %c0_i32, %c0_i32_0 : i32, i32
  }
  func.func @transform_4(%arg0: i32) -> (i32, i32, i32) {
    %c0_i32 = arith.constant 0 : i32
    %c0_i32_0 = arith.constant 0 : i32
    %c0_i32_1 = arith.constant 0 : i32
    return %arg0, %c0_i32, %c0_i32_0 : i32, i32, i32
  }
}

</mosaic_0001>

<llo_original>
// kernel: self_attention_layer.1
$region0: #{self_attention_layer.1}
  #allocation0 [shape = 'u32[]', space=smem, size = 0x4, offset = 0x4, fixed_abs, tag = 'smem constant byte address 0x4 - core index']
  #allocation1 [shape = 'u32[72,128]{1,0:T(1,128)}', space=vmem, size = 0x9000, scoped, tag = 'internal scratch']
  %s0 = inlined_call_operand.vmem [shape: f32[2,8,32], index: 0, kind: input, shape index: {}]
  %s1 = inlined_call_operand.vmem [shape: f32[2,8,32], index: 1, kind: input, shape index: {}]
  %s2 = inlined_call_operand.vmem [shape: f32[32,128], index: 2, kind: input, shape index: {}]
  %s3 = inlined_call_operand.vmem [shape: f32[8,32], index: 3, kind: input, shape index: {}]
  %s4 = inlined_call_operand.vmem [shape: f32[2,8,32], index: 4, kind: output, shape index: {}]
  %s5 = sld [smem:[#allocation0]]
  $region49: #{self_attention_layer.1} parent=0
    _
  %s7 = ssub.s32 1, %s5
  %s8 = scalar_select 0, %s7, %s5
  loop: start=0, step=1, limit=4
  $region2: #{self_attention_layer.1} parent=0 // loop_pre_header
    _
  $region3: #{self_attention_layer.1} parent=0 // loop_header
    %s10 = sphi 0, %s14
    %p11 = scmp.ge.s32.totalorder %s10, 4
    %s20 = sphi 0, %s22
    %s23 = sphi 0, %s20
    %s24 = sphi 0, %s23
    %s40 = sphi 0, %s24
    %s46 = sphi 0, %s48
    %s49 = sphi 0, %s46
    %s50 = sphi 0, %s49
    %s66 = sphi 0, %s50
    %s70 = sphi 0, %s70
    %s72 = sphi 0, %s70
    %s73 = sphi 0, %s72
    %s87 = sphi 0, %s73
    %s91 = sphi 0, %s91
    %s93 = sphi 0, %s91
    %s94 = sphi 0, %s93
    %s108 = sphi 0, %s94
    %s114 = sphi 0, %s116
    %s117 = sphi 0, %s114
    %s118 = sphi 0, %s117
    %s134 = sphi 0, %s118
  $region4: #{self_attention_layer.1} parent=0 // loop_header_branch
    %13 = sbr.rel (%p11) target = $region8
  $region5: #{self_attention_layer.1} parent=0 // loop_body
    %s15 = ssub.s32 %s10, 1
    %s16 = ssub.s32 %s10, 2
    %s17 = sadd.s32 %s10, 1
    %s18 = ssub.s32 %s10, %s17
    %p19 = scmp.eq.s32.totalorder %s18, 0
    %s21 = sadd.s32 %s20, 1
    %s22 = scalar_select %p19, %s20, %s21
    %p25 = pneg %p19
    %p26 = scmp.eq.s32.totalorder %s10, 1
    %p27 = por %p25, %p26
    %p28 = scmp.ne.s32.totalorder %s20, %s23
    %p29 = scmp.eq.s32.totalorder %s10, 0
    %p30 = por %p28, %p29
    %p31 = scmp.ne.s32.totalorder %s20, %s23
    %p32 = scmp.eq.s32.totalorder %s15, 1
    %p33 = por %p31, %p32
    %p34 = scmp.ne.s32.totalorder %s23, %s24
    %p35 = scmp.eq.s32.totalorder %s15, 0
    %p36 = por %p34, %p35
    %p37 = scmp.ne.s32.totalorder %s23, %s24
    %p38 = scmp.eq.s32.totalorder %s16, 1
    %p39 = por %p37, %p38
    %p41 = scmp.ne.s32.totalorder %s24, %s40
    %p42 = scmp.eq.s32.totalorder %s16, 0
    %p43 = por %p41, %p42
    %s44 = ssub.s32 %s10, %s17
    %p45 = scmp.eq.s32.totalorder %s44, 0
    %s47 = sadd.s32 %s46, 1
    %s48 = scalar_select %p45, %s46, %s47
    %p51 = pneg %p45
    %p52 = scmp.eq.s32.totalorder %s10, 1
    %p53 = por %p51, %p52
    %p54 = scmp.ne.s32.totalorder %s46, %s49
    %p55 = scmp.eq.s32.totalorder %s10, 0
    %p56 = por %p54, %p55
    %p57 = scmp.ne.s32.totalorder %s46, %s49
    %p58 = scmp.eq.s32.totalorder %s15, 1
    %p59 = por %p57, %p58
    %p60 = scmp.ne.s32.totalorder %s49, %s50
    %p61 = scmp.eq.s32.totalorder %s15, 0
    %p62 = por %p60, %p61
    %p63 = scmp.ne.s32.totalorder %s49, %s50
    %p64 = scmp.eq.s32.totalorder %s16, 1
    %p65 = por %p63, %p64
    %p67 = scmp.ne.s32.totalorder %s50, %s66
    %p68 = scmp.eq.s32.totalorder %s16, 0
    %p69 = por %p67, %p68
    %s71 = sadd.s32 %s70, 1
    %p74 = scmp.eq.s32.totalorder %s10, 1
    %p75 = scmp.ne.s32.totalorder %s70, %s72
    %p76 = scmp.eq.s32.totalorder %s10, 0
    %p77 = por %p75, %p76
    %p78 = scmp.ne.s32.totalorder %s70, %s72
    %p79 = scmp.eq.s32.totalorder %s15, 1
    %p80 = por %p78, %p79
    %p81 = scmp.ne.s32.totalorder %s72, %s73
    %p82 = scmp.eq.s32.totalorder %s15, 0
    %p83 = por %p81, %p82
    %p84 = scmp.ne.s32.totalorder %s72, %s73
    %p85 = scmp.eq.s32.totalorder %s16, 1
    %p86 = por %p84, %p85
    %p88 = scmp.ne.s32.totalorder %s73, %s87
    %p89 = scmp.eq.s32.totalorder %s16, 0
    %p90 = por %p88, %p89
    %s92 = sadd.s32 %s91, 1
    %p95 = scmp.eq.s32.totalorder %s10, 1
    %p96 = scmp.ne.s32.totalorder %s91, %s93
    %p97 = scmp.eq.s32.totalorder %s10, 0
    %p98 = por %p96, %p97
    %p99 = scmp.ne.s32.totalorder %s91, %s93
    %p100 = scmp.eq.s32.totalorder %s15, 1
    %p101 = por %p99, %p100
    %p102 = scmp.ne.s32.totalorder %s93, %s94
    %p103 = scmp.eq.s32.totalorder %s15, 0
    %p104 = por %p102, %p103
    %p105 = scmp.ne.s32.totalorder %s93, %s94
    %p106 = scmp.eq.s32.totalorder %s16, 1
    %p107 = por %p105, %p106
    %p109 = scmp.ne.s32.totalorder %s94, %s108
    %p110 = scmp.eq.s32.totalorder %s16, 0
    %p111 = por %p109, %p110
    %s112 = ssub.s32 %s10, %s17
    %p113 = scmp.eq.s32.totalorder %s112, 0
    %s115 = sadd.s32 %s114, 1
    %s116 = scalar_select %p113, %s114, %s115
    %p119 = pneg %p113
    %p120 = scmp.eq.s32.totalorder %s10, 1
    %p121 = por %p119, %p120
    %p122 = scmp.ne.s32.totalorder %s114, %s117
    %p123 = scmp.eq.s32.totalorder %s10, 0
    %p124 = por %p122, %p123
    %p125 = scmp.ne.s32.totalorder %s114, %s117
    %p126 = scmp.eq.s32.totalorder %s15, 1
    %p127 = por %p125, %p126
    %p128 = scmp.ne.s32.totalorder %s117, %s118
    %p129 = scmp.eq.s32.totalorder %s15, 0
    %p130 = por %p128, %p129
    %p131 = scmp.ne.s32.totalorder %s117, %s118
    %p132 = scmp.eq.s32.totalorder %s16, 1
    %p133 = por %p131, %p132
    %p135 = scmp.ne.s32.totalorder %s118, %s134
    %p136 = scmp.eq.s32.totalorder %s16, 0
    %p137 = por %p135, %p136
    %p138 = scmp.le.s32.totalorder 1, %s10
    %p139 = scmp.lt.s32.totalorder %s10, 3
    %p140 = pnand %p138, %p139
    %p141 = pneg %p140
    // Predicated region
    $region9: #{self_attention_layer.1} parent=5 // pred_check
      _
    $region10: #{self_attention_layer.1} parent=5 // pred_check_branch
      %143 = sbr.rel (%p140) target = $region12
    $region11: #{self_attention_layer.1} parent=5 // pred_region
      %s144 = ssub.s32 %s10, 1
      // Predicated region
      $region13: #{self_attention_layer.1} parent=11 // pred_check
        %p145 = pneg %p83
      $region14: #{self_attention_layer.1} parent=11 // pred_check_branch
        %147 = sbr.rel (%p145) target = $region16
      $region15: #{self_attention_layer.1} parent=11 // pred_region
        _
      $region16: #{self_attention_layer.1} parent=11 // pred_fallthru
        _
      // Predicated region
      $region17: #{self_attention_layer.1} parent=11 // pred_check
        %p148 = pneg %p104
      $region18: #{self_attention_layer.1} parent=11 // pred_check_branch
        %150 = sbr.rel (%p148) target = $region20
      $region19: #{self_attention_layer.1} parent=11 // pred_region
        _
      $region20: #{self_attention_layer.1} parent=11 // pred_fallthru
        _
    $region12: #{self_attention_layer.1} parent=5 // pred_fallthru
      _
    %p151 = scmp.lt.s32.totalorder %s10, 2
    // Predicated region
    $region21: #{self_attention_layer.1} parent=5 // pred_check
      %p152 = pneg %p151
    $region22: #{self_attention_layer.1} parent=5 // pred_check_branch
      %154 = sbr.rel (%p152) target = $region24
    $region23: #{self_attention_layer.1} parent=5 // pred_region
      // Predicated region
      $region25: #{self_attention_layer.1} parent=23 // pred_check
        %p155 = pneg %p30
      $region26: #{self_attention_layer.1} parent=23 // pred_check_branch
        %157 = sbr.rel (%p155) target = $region28
      $region27: #{self_attention_layer.1} parent=23 // pred_region
        %p158 = scmp.lt.s32.totalorder %s10, 1
        %s159 = scalar_select %p158, %s10, 1
        %s160 = smul.addr %s159, 8
        %s161 = scalar_lea.vmem %s0, %s160
      $region28: #{self_attention_layer.1} parent=23 // pred_fallthru
        _
      // Predicated region
      $region29: #{self_attention_layer.1} parent=23 // pred_check
        %p162 = pneg %p56
      $region30: #{self_attention_layer.1} parent=23 // pred_check_branch
        %164 = sbr.rel (%p162) target = $region32
      $region31: #{self_attention_layer.1} parent=23 // pred_region
        %p165 = scmp.lt.s32.totalorder %s10, 1
        %s166 = scalar_select %p165, %s10, 1
        %s167 = smul.addr %s166, 8
        %s168 = scalar_lea.vmem %s1, %s167
      $region32: #{self_attention_layer.1} parent=23 // pred_fallthru
        _
    $region24: #{self_attention_layer.1} parent=5 // pred_fallthru
      _
    %p169 = scmp.le.s32.totalorder 1, %s10
    %p170 = scmp.lt.s32.totalorder %s10, 3
    %p171 = pnand %p169, %p170
    %p172 = pneg %p171
    // Predicated region
    $region33: #{self_attention_layer.1} parent=5 // pred_check
      _
    $region34: #{self_attention_layer.1} parent=5 // pred_check_branch
      %174 = sbr.rel (%p171) target = $region36
    $region35: #{self_attention_layer.1} parent=5 // pred_region
      %s175 = ssub.s32 %s10, 1
      %p176 = scmp.lt.s32.totalorder %s15, 1
      %s177 = scalar_select %p176, %s15, 1
      %s178 = smul.addr %s177, 8
      %s179 = scalar_lea.vmem %s0, %s178
      %p180 = pneg %p36
      %p181 = pneg %p33
      %p182 = scmp.lt.s32.totalorder %s15, 1
      %s183 = scalar_select %p182, %s15, 1
      %s184 = smul.addr %s183, 8
      %s185 = scalar_lea.vmem %s1, %s184
      %p186 = pneg %p62
      %p187 = pneg %p59
      %p188 = pneg %p83
      %p189 = pneg %p80
      %p190 = pneg %p104
      %p191 = pneg %p101
      %p192 = pneg %p130
      %p193 = pneg %p127
      %p194 = scmp.lt.s32.totalorder %s15, 1
      %s195 = scalar_select %p194, %s15, 1
      %s196 = smul.addr %s195, 8
      %s197 = scalar_lea.vmem %s4, %s196
      %p198 = scmp.lt.s32.totalorder %s15, 1
      %s199 = scalar_select %p198, %s15, 1
      %s200 = smul.addr %s199, 8
      %s201 = scalar_lea.vmem %s0, %s200
      %p202 = scmp.lt.s32.totalorder %s15, 1
      %s203 = scalar_select %p202, %s15, 1
      %s204 = smul.addr %s203, 8
      %s205 = scalar_lea.vmem %s1, %s204
      %p206 = scmp.lt.s32.totalorder %s15, 1
      %s207 = scalar_select %p206, %s15, 1
      %s208 = smul.addr %s207, 8
      %s209 = scalar_lea.vmem %s4, %s208
      %v210 = vld [vmem:[%s201] sm:$0xff]
      %v211 = vld [vmem:[%s205] sm:$0xff]
      %v212 = vadd.f32 %v210, %v211
      %v213 = vld [vmem:[%s2] sm:$0xff]
      %v214 = vld [vmem:[%s2 + $0x8] sm:$0xff]
      %v215 = vld [vmem:[%s2 + $0x10] sm:$0xff]
      %v216 = vld [vmem:[%s2 + $0x18] sm:$0xff]
      %v217 = vld [vmem:[%s3] sm:$0xff]
      %vm218 = vcmask 261120
      %v220 = vsel %vm218, %v212, 0
      %222 = vmatpush.msra.mxu0 0.0
      %223 = vmatpush.msra.mxu0 0.0
      %224 = vmatpush.msra.mxu0 0.0
      %225 = vmatpush.msra.mxu0 0.0
      %226 = vmatpush.msra.mxu0 0.0
      %227 = vmatpush.msra.mxu0 0.0
      %228 = vmatpush.msra.mxu0 0.0
      %229 = vmatpush.msra.mxu0 0.0
      %230 = vmatpush.msra.mxu0 0.0
      %231 = vmatpush.msra.mxu0 0.0
      %232 = vmatpush.msra.mxu0 0.0
      %233 = vmatpush.msra.mxu0 0.0
      %v234 = vand.u32 %v216, 4294901760
      %235 = vmatpush.msra.mxu0 %v234
      %v236 = vand.u32 %v215, 4294901760
      %237 = vmatpush.msra.mxu0 %v236
      %v238 = vand.u32 %v214, 4294901760
      %239 = vmatpush.msra.mxu0 %v238
      %v240 = vand.u32 %v213, 4294901760
      %241 = vmatpush.msra.mxu0 %v240
      %v242 = vand.u32 %v220, 4294901760
      %v243 = vsub.f32 %v220, %v242
      %v244 = vand.u32 %v243, 4294901760
      %v245 = vsub.f32 %v243, %v244
      %v246 = vand.u32 %v245, 4294901760
      %247 = vmatmul.f32.gmra.mxu0 %v246
      %v248 = vpop.f32.mrf.mxu0
      %v249 = vadd.f32 0.0, %v248
      %250 = vdwg.mxu0
      %251 = vmatpush.msra.mxu0 0.0
      %252 = vmatpush.msra.mxu0 0.0
      %253 = vmatpush.msra.mxu0 0.0
      %254 = vmatpush.msra.mxu0 0.0
      %255 = vmatpush.msra.mxu0 0.0
      %256 = vmatpush.msra.mxu0 0.0
      %257 = vmatpush.msra.mxu0 0.0
      %258 = vmatpush.msra.mxu0 0.0
      %259 = vmatpush.msra.mxu0 0.0
      %260 = vmatpush.msra.mxu0 0.0
      %261 = vmatpush.msra.mxu0 0.0
      %262 = vmatpush.msra.mxu0 0.0
      %v263 = vand.u32 %v216, 4294901760
      %v264 = vsub.f32 %v216, %v263
      %v265 = vand.u32 %v264, 4294901760
      %v266 = vsub.f32 %v264, %v265
      %v267 = vand.u32 %v266, 4294901760
      %268 = vmatpush.msra.mxu0 %v267
      %v269 = vand.u32 %v215, 4294901760
      %v270 = vsub.f32 %v215, %v269
      %v271 = vand.u32 %v270, 4294901760
      %v272 = vsub.f32 %v270, %v271
      %v273 = vand.u32 %v272, 4294901760
      %274 = vmatpush.msra.mxu0 %v273
      %v275 = vand.u32 %v214, 4294901760
      %v276 = vsub.f32 %v214, %v275
      %v277 = vand.u32 %v276, 4294901760
      %v278 = vsub.f32 %v276, %v277
      %v279 = vand.u32 %v278, 4294901760
      %280 = vmatpush.msra.mxu0 %v279
      %v281 = vand.u32 %v213, 4294901760
      %v282 = vsub.f32 %v213, %v281
      %v283 = vand.u32 %v282, 4294901760
      %v284 = vsub.f32 %v282, %v283
      %v285 = vand.u32 %v284, 4294901760
      %286 = vmatpush.msra.mxu0 %v285
      %v287 = vand.u32 %v220, 4294901760
      %288 = vmatmul.f32.gmra.mxu0 %v287
      %v289 = vpop.f32.mrf.mxu0
      %v290 = vadd.f32 %v249, %v289
      %291 = vdwg.mxu0
      %292 = vmatpush.msra.mxu0 0.0
      %293 = vmatpush.msra.mxu0 0.0
      %294 = vmatpush.msra.mxu0 0.0
      %295 = vmatpush.msra.mxu0 0.0
      %296 = vmatpush.msra.mxu0 0.0
      %297 = vmatpush.msra.mxu0 0.0
      %298 = vmatpush.msra.mxu0 0.0
      %299 = vmatpush.msra.mxu0 0.0
      %300 = vmatpush.msra.mxu0 0.0
      %301 = vmatpush.msra.mxu0 0.0
      %302 = vmatpush.msra.mxu0 0.0
      %303 = vmatpush.msra.mxu0 0.0
      %v304 = vand.u32 %v216, 4294901760
      %v305 = vsub.f32 %v216, %v304
      %306 = vmatpush.msra.mxu0 %v305
      %v307 = vand.u32 %v215, 4294901760
      %v308 = vsub.f32 %v215, %v307
      %309 = vmatpush.msra.mxu0 %v308
      %v310 = vand.u32 %v214, 4294901760
      %v311 = vsub.f32 %v214, %v310
      %312 = vmatpush.msra.mxu0 %v311
      %v313 = vand.u32 %v213, 4294901760
      %v314 = vsub.f32 %v213, %v313
      %315 = vmatpush.msra.mxu0 %v314
      %v316 = vand.u32 %v220, 4294901760
      %v317 = vsub.f32 %v220, %v316
      %318 = vmatmul.f32.gmra.mxu0 %v317
      %v319 = vpop.f32.mrf.mxu0
      %v320 = vadd.f32 %v290, %v319
      %321 = vdwg.mxu0
      %322 = vmatpush.msra.mxu0 0.0
      %323 = vmatpush.msra.mxu0 0.0
      %324 = vmatpush.msra.mxu0 0.0
      %325 = vmatpush.msra.mxu0 0.0
      %326 = vmatpush.msra.mxu0 0.0
      %327 = vmatpush.msra.mxu0 0.0
      %328 = vmatpush.msra.mxu0 0.0
      %329 = vmatpush.msra.mxu0 0.0
      %330 = vmatpush.msra.mxu0 0.0
      %331 = vmatpush.msra.mxu0 0.0
      %332 = vmatpush.msra.mxu0 0.0
      %333 = vmatpush.msra.mxu0 0.0
      %v334 = vand.u32 %v216, 4294901760
      %335 = vmatpush.msra.mxu0 %v334
      %v336 = vand.u32 %v215, 4294901760
      %337 = vmatpush.msra.mxu0 %v336
      %v338 = vand.u32 %v214, 4294901760
      %339 = vmatpush.msra.mxu0 %v338
      %v340 = vand.u32 %v213, 4294901760
      %341 = vmatpush.msra.mxu0 %v340
      %v342 = vand.u32 %v220, 4294901760
      %v343 = vsub.f32 %v220, %v342
      %v344 = vand.u32 %v343, 4294901760
      %345 = vmatmul.f32.gmra.mxu0 %v344
      %v346 = vpop.f32.mrf.mxu0
      %v347 = vadd.f32 %v320, %v346
      %348 = vdwg.mxu0
      %349 = vmatpush.msra.mxu0 0.0
      %350 = vmatpush.msra.mxu0 0.0
      %351 = vmatpush.msra.mxu0 0.0
      %352 = vmatpush.msra.mxu0 0.0
      %353 = vmatpush.msra.mxu0 0.0
      %354 = vmatpush.msra.mxu0 0.0
      %355 = vmatpush.msra.mxu0 0.0
      %356 = vmatpush.msra.mxu0 0.0
      %357 = vmatpush.msra.mxu0 0.0
      %358 = vmatpush.msra.mxu0 0.0
      %359 = vmatpush.msra.mxu0 0.0
      %360 = vmatpush.msra.mxu0 0.0
      %v361 = vand.u32 %v216, 4294901760
      %v362 = vsub.f32 %v216, %v361
      %v363 = vand.u32 %v362, 4294901760
      %364 = vmatpush.msra.mxu0 %v363
      %v365 = vand.u32 %v215, 4294901760
      %v366 = vsub.f32 %v215, %v365
      %v367 = vand.u32 %v366, 4294901760
      %368 = vmatpush.msra.mxu0 %v367
      %v369 = vand.u32 %v214, 4294901760
      %v370 = vsub.f32 %v214, %v369
      %v371 = vand.u32 %v370, 4294901760
      %372 = vmatpush.msra.mxu0 %v371
      %v373 = vand.u32 %v213, 4294901760
      %v374 = vsub.f32 %v213, %v373
      %v375 = vand.u32 %v374, 4294901760
      %376 = vmatpush.msra.mxu0 %v375
      %v377 = vand.u32 %v220, 4294901760
      %378 = vmatmul.f32.gmra.mxu0 %v377
      %v379 = vpop.f32.mrf.mxu0
      %v380 = vadd.f32 %v347, %v379
      %381 = vdwg.mxu0
      %382 = vmatpush.msra.mxu0 0.0
      %383 = vmatpush.msra.mxu0 0.0
      %384 = vmatpush.msra.mxu0 0.0
      %385 = vmatpush.msra.mxu0 0.0
      %386 = vmatpush.msra.mxu0 0.0
      %387 = vmatpush.msra.mxu0 0.0
      %388 = vmatpush.msra.mxu0 0.0
      %389 = vmatpush.msra.mxu0 0.0
      %390 = vmatpush.msra.mxu0 0.0
      %391 = vmatpush.msra.mxu0 0.0
      %392 = vmatpush.msra.mxu0 0.0
      %393 = vmatpush.msra.mxu0 0.0
      %v394 = vand.u32 %v216, 4294901760
      %395 = vmatpush.msra.mxu0 %v394
      %v396 = vand.u32 %v215, 4294901760
      %397 = vmatpush.msra.mxu0 %v396
      %v398 = vand.u32 %v214, 4294901760
      %399 = vmatpush.msra.mxu0 %v398
      %v400 = vand.u32 %v213, 4294901760
      %401 = vmatpush.msra.mxu0 %v400
      %v402 = vand.u32 %v220, 4294901760
      %403 = vmatmul.f32.gmra.mxu0 %v402
      %v404 = vpop.f32.mrf.mxu0
      %v405 = vadd.f32 %v380, %v404
      %406 = vdwg.mxu0
      %v407 = vperm.slane %v217, 0
      %v408 = vadd.f32 %v405, %v407
      %v409 = vmul.f32 %v408, 0.35355338
      %v410 = vperm.slane %v217, 1
      %412 = vrot.lane.b32.xlu0 %v410, 32
      %v413 = vpop.permute.xlu0 %412
      %v415 = vadd.f32 %v405, %v413
      %v416 = vperm.slane %v217, 2
      %421 = vrot.lane.b32.xlu0 %v213, 64
      %v422 = vpop.permute.xlu0 %421
      %423 = vrot.lane.b32.xlu0 %v214, 64
      %v424 = vpop.permute.xlu0 %423
      %425 = vrot.lane.b32.xlu0 %v215, 64
      %v426 = vpop.permute.xlu0 %425
      %427 = vrot.lane.b32.xlu0 %v216, 64
      %v428 = vpop.permute.xlu0 %427
      %v434 = vsel %vm218, %v210, 0
      %436 = vmatpush.msra.mxu0 0.0
      %437 = vmatpush.msra.mxu0 0.0
      %438 = vmatpush.msra.mxu0 0.0
      %439 = vmatpush.msra.mxu0 0.0
      %440 = vmatpush.msra.mxu0 0.0
      %441 = vmatpush.msra.mxu0 0.0
      %442 = vmatpush.msra.mxu0 0.0
      %443 = vmatpush.msra.mxu0 0.0
      %444 = vmatpush.msra.mxu0 0.0
      %445 = vmatpush.msra.mxu0 0.0
      %446 = vmatpush.msra.mxu0 0.0
      %447 = vmatpush.msra.mxu0 0.0
      %v448 = vand.u32 %v428, 4294901760
      %449 = vmatpush.msra.mxu0 %v448
      %v450 = vand.u32 %v426, 4294901760
      %451 = vmatpush.msra.mxu0 %v450
      %v452 = vand.u32 %v424, 4294901760
      %453 = vmatpush.msra.mxu0 %v452
      %v454 = vand.u32 %v422, 4294901760
      %455 = vmatpush.msra.mxu0 %v454
      %v456 = vand.u32 %v434, 4294901760
      %v457 = vsub.f32 %v434, %v456
      %v458 = vand.u32 %v457, 4294901760
      %v459 = vsub.f32 %v457, %v458
      %v460 = vand.u32 %v459, 4294901760
      %461 = vmatmul.f32.gmra.mxu0 %v460
      %v462 = vpop.f32.mrf.mxu0
      %v463 = vadd.f32 %v416, %v462
      %464 = vdwg.mxu0
      %465 = vmatpush.msra.mxu0 0.0
      %466 = vmatpush.msra.mxu0 0.0
      %467 = vmatpush.msra.mxu0 0.0
      %468 = vmatpush.msra.mxu0 0.0
      %469 = vmatpush.msra.mxu0 0.0
      %470 = vmatpush.msra.mxu0 0.0
      %471 = vmatpush.msra.mxu0 0.0
      %472 = vmatpush.msra.mxu0 0.0
      %473 = vmatpush.msra.mxu0 0.0
      %474 = vmatpush.msra.mxu0 0.0
      %475 = vmatpush.msra.mxu0 0.0
      %476 = vmatpush.msra.mxu0 0.0
      %v477 = vand.u32 %v428, 4294901760
      %v478 = vsub.f32 %v428, %v477
      %v479 = vand.u32 %v478, 4294901760
      %v480 = vsub.f32 %v478, %v479
      %v481 = vand.u32 %v480, 4294901760
      %482 = vmatpush.msra.mxu0 %v481
      %v483 = vand.u32 %v426, 4294901760
      %v484 = vsub.f32 %v426, %v483
      %v485 = vand.u32 %v484, 4294901760
      %v486 = vsub.f32 %v484, %v485
      %v487 = vand.u32 %v486, 4294901760
      %488 = vmatpush.msra.mxu0 %v487
      %v489 = vand.u32 %v424, 4294901760
      %v490 = vsub.f32 %v424, %v489
      %v491 = vand.u32 %v490, 4294901760
      %v492 = vsub.f32 %v490, %v491
      %v493 = vand.u32 %v492, 4294901760
      %494 = vmatpush.msra.mxu0 %v493
      %v495 = vand.u32 %v422, 4294901760
      %v496 = vsub.f32 %v422, %v495
      %v497 = vand.u32 %v496, 4294901760
      %v498 = vsub.f32 %v496, %v497
      %v499 = vand.u32 %v498, 4294901760
      %500 = vmatpush.msra.mxu0 %v499
      %v501 = vand.u32 %v434, 4294901760
      %502 = vmatmul.f32.gmra.mxu0 %v501
      %v503 = vpop.f32.mrf.mxu0
      %v504 = vadd.f32 %v463, %v503
      %505 = vdwg.mxu0
      %506 = vmatpush.msra.mxu0 0.0
      %507 = vmatpush.msra.mxu0 0.0
      %508 = vmatpush.msra.mxu0 0.0
      %509 = vmatpush.msra.mxu0 0.0
      %510 = vmatpush.msra.mxu0 0.0
      %511 = vmatpush.msra.mxu0 0.0
      %512 = vmatpush.msra.mxu0 0.0
      %513 = vmatpush.msra.mxu0 0.0
      %514 = vmatpush.msra.mxu0 0.0
      %515 = vmatpush.msra.mxu0 0.0
      %516 = vmatpush.msra.mxu0 0.0
      %517 = vmatpush.msra.mxu0 0.0
      %v518 = vand.u32 %v428, 4294901760
      %v519 = vsub.f32 %v428, %v518
      %520 = vmatpush.msra.mxu0 %v519
      %v521 = vand.u32 %v426, 4294901760
      %v522 = vsub.f32 %v426, %v521
      %523 = vmatpush.msra.mxu0 %v522
      %v524 = vand.u32 %v424, 4294901760
      %v525 = vsub.f32 %v424, %v524
      %526 = vmatpush.msra.mxu0 %v525
      %v527 = vand.u32 %v422, 4294901760
      %v528 = vsub.f32 %v422, %v527
      %529 = vmatpush.msra.mxu0 %v528
      %v530 = vand.u32 %v434, 4294901760
      %v531 = vsub.f32 %v434, %v530
      %532 = vmatmul.f32.gmra.mxu0 %v531
      %v533 = vpop.f32.mrf.mxu0
      %v534 = vadd.f32 %v504, %v533
      %535 = vdwg.mxu0
      %536 = vmatpush.msra.mxu0 0.0
      %537 = vmatpush.msra.mxu0 0.0
      %538 = vmatpush.msra.mxu0 0.0
      %539 = vmatpush.msra.mxu0 0.0
      %540 = vmatpush.msra.mxu0 0.0
      %541 = vmatpush.msra.mxu0 0.0
      %542 = vmatpush.msra.mxu0 0.0
      %543 = vmatpush.msra.mxu0 0.0
      %544 = vmatpush.msra.mxu0 0.0
      %545 = vmatpush.msra.mxu0 0.0
      %546 = vmatpush.msra.mxu0 0.0
      %547 = vmatpush.msra.mxu0 0.0
      %v548 = vand.u32 %v428, 4294901760
      %549 = vmatpush.msra.mxu0 %v548
      %v550 = vand.u32 %v426, 4294901760
      %551 = vmatpush.msra.mxu0 %v550
      %v552 = vand.u32 %v424, 4294901760
      %553 = vmatpush.msra.mxu0 %v552
      %v554 = vand.u32 %v422, 4294901760
      %555 = vmatpush.msra.mxu0 %v554
      %v556 = vand.u32 %v434, 4294901760
      %v557 = vsub.f32 %v434, %v556
      %v558 = vand.u32 %v557, 4294901760
      %559 = vmatmul.f32.gmra.mxu0 %v558
      %v560 = vpop.f32.mrf.mxu0
      %v561 = vadd.f32 %v534, %v560
      %562 = vdwg.mxu0
      %563 = vmatpush.msra.mxu0 0.0
      %564 = vmatpush.msra.mxu0 0.0
      %565 = vmatpush.msra.mxu0 0.0
      %566 = vmatpush.msra.mxu0 0.0
      %567 = vmatpush.msra.mxu0 0.0
      %568 = vmatpush.msra.mxu0 0.0
      %569 = vmatpush.msra.mxu0 0.0
      %570 = vmatpush.msra.mxu0 0.0
      %571 = vmatpush.msra.mxu0 0.0
      %572 = vmatpush.msra.mxu0 0.0
      %573 = vmatpush.msra.mxu0 0.0
      %574 = vmatpush.msra.mxu0 0.0
      %v575 = vand.u32 %v428, 4294901760
      %v576 = vsub.f32 %v428, %v575
      %v577 = vand.u32 %v576, 4294901760
      %578 = vmatpush.msra.mxu0 %v577
      %v579 = vand.u32 %v426, 4294901760
      %v580 = vsub.f32 %v426, %v579
      %v581 = vand.u32 %v580, 4294901760
      %582 = vmatpush.msra.mxu0 %v581
      %v583 = vand.u32 %v424, 4294901760
      %v584 = vsub.f32 %v424, %v583
      %v585 = vand.u32 %v584, 4294901760
      %586 = vmatpush.msra.mxu0 %v585
      %v587 = vand.u32 %v422, 4294901760
      %v588 = vsub.f32 %v422, %v587
      %v589 = vand.u32 %v588, 4294901760
      %590 = vmatpush.msra.mxu0 %v589
      %v591 = vand.u32 %v434, 4294901760
      %592 = vmatmul.f32.gmra.mxu0 %v591
      %v593 = vpop.f32.mrf.mxu0
      %v594 = vadd.f32 %v561, %v593
      %595 = vdwg.mxu0
      %596 = vmatpush.msra.mxu0 0.0
      %597 = vmatpush.msra.mxu0 0.0
      %598 = vmatpush.msra.mxu0 0.0
      %599 = vmatpush.msra.mxu0 0.0
      %600 = vmatpush.msra.mxu0 0.0
      %601 = vmatpush.msra.mxu0 0.0
      %602 = vmatpush.msra.mxu0 0.0
      %603 = vmatpush.msra.mxu0 0.0
      %604 = vmatpush.msra.mxu0 0.0
      %605 = vmatpush.msra.mxu0 0.0
      %606 = vmatpush.msra.mxu0 0.0
      %607 = vmatpush.msra.mxu0 0.0
      %v608 = vand.u32 %v428, 4294901760
      %609 = vmatpush.msra.mxu0 %v608
      %v610 = vand.u32 %v426, 4294901760
      %611 = vmatpush.msra.mxu0 %v610
      %v612 = vand.u32 %v424, 4294901760
      %613 = vmatpush.msra.mxu0 %v612
      %v614 = vand.u32 %v422, 4294901760
      %615 = vmatpush.msra.mxu0 %v614
      %v616 = vand.u32 %v434, 4294901760
      %617 = vmatmul.f32.gmra.mxu0 %v616
      %v618 = vpop.f32.mrf.mxu0
      %v619 = vadd.f32 %v594, %v618
      %620 = vdwg.mxu0
      %622 = vrot.lane.b32.xlu0 %v415, 96
      %v623 = vpop.permute.xlu0 %622
      %vm624 = vcmask 64512
      %v626 = vsel %vm624, %v409, 0
      %v628 = vsel %vm624, %v623, 0
      %630 = vmatpush.xpose.msra.mxu0 0.0
      %631 = vmatpush.xpose.msra.mxu0 0.0
      %632 = vmatpush.xpose.msra.mxu0 0.0
      %633 = vmatpush.xpose.msra.mxu0 0.0
      %634 = vmatpush.xpose.msra.mxu0 0.0
      %635 = vmatpush.xpose.msra.mxu0 0.0
      %636 = vmatpush.xpose.msra.mxu0 0.0
      %637 = vmatpush.xpose.msra.mxu0 0.0
      %638 = vmatpush.xpose.msra.mxu0 0.0
      %639 = vmatpush.xpose.msra.mxu0 0.0
      %640 = vmatpush.xpose.msra.mxu0 0.0
      %641 = vmatpush.xpose.msra.mxu0 0.0
      %642 = vmatpush.xpose.msra.mxu0 0.0
      %643 = vmatpush.xpose.msra.mxu0 0.0
      %644 = vmatpush.xpose.msra.mxu0 0.0
      %v645 = vand.u32 %v628, 4294901760
      %646 = vmatpush.xpose.msra.mxu0 %v645
      %v647 = vand.u32 %v626, 4294901760
      %v648 = vsub.f32 %v626, %v647
      %v649 = vand.u32 %v648, 4294901760
      %v650 = vsub.f32 %v648, %v649
      %v651 = vand.u32 %v650, 4294901760
      %652 = vmatmul.f32.gmra.mxu0 %v651
      %v653 = vpop.f32.mrf.mxu0
      %v654 = vadd.f32 0.0, %v653
      %655 = vdwg.mxu0
      %656 = vmatpush.xpose.msra.mxu0 0.0
      %657 = vmatpush.xpose.msra.mxu0 0.0
      %658 = vmatpush.xpose.msra.mxu0 0.0
      %659 = vmatpush.xpose.msra.mxu0 0.0
      %660 = vmatpush.xpose.msra.mxu0 0.0
      %661 = vmatpush.xpose.msra.mxu0 0.0
      %662 = vmatpush.xpose.msra.mxu0 0.0
      %663 = vmatpush.xpose.msra.mxu0 0.0
      %664 = vmatpush.xpose.msra.mxu0 0.0
      %665 = vmatpush.xpose.msra.mxu0 0.0
      %666 = vmatpush.xpose.msra.mxu0 0.0
      %667 = vmatpush.xpose.msra.mxu0 0.0
      %668 = vmatpush.xpose.msra.mxu0 0.0
      %669 = vmatpush.xpose.msra.mxu0 0.0
      %670 = vmatpush.xpose.msra.mxu0 0.0
      %v671 = vand.u32 %v628, 4294901760
      %v672 = vsub.f32 %v628, %v671
      %v673 = vand.u32 %v672, 4294901760
      %v674 = vsub.f32 %v672, %v673
      %v675 = vand.u32 %v674, 4294901760
      %676 = vmatpush.xpose.msra.mxu0 %v675
      %v677 = vand.u32 %v626, 4294901760
      %678 = vmatmul.f32.gmra.mxu0 %v677
      %v679 = vpop.f32.mrf.mxu0
      %v680 = vadd.f32 %v654, %v679
      %681 = vdwg.mxu0
      %682 = vmatpush.xpose.msra.mxu0 0.0
      %683 = vmatpush.xpose.msra.mxu0 0.0
      %684 = vmatpush.xpose.msra.mxu0 0.0
      %685 = vmatpush.xpose.msra.mxu0 0.0
      %686 = vmatpush.xpose.msra.mxu0 0.0
      %687 = vmatpush.xpose.msra.mxu0 0.0
      %688 = vmatpush.xpose.msra.mxu0 0.0
      %689 = vmatpush.xpose.msra.mxu0 0.0
      %690 = vmatpush.xpose.msra.mxu0 0.0
      %691 = vmatpush.xpose.msra.mxu0 0.0
      %692 = vmatpush.xpose.msra.mxu0 0.0
      %693 = vmatpush.xpose.msra.mxu0 0.0
      %694 = vmatpush.xpose.msra.mxu0 0.0
      %695 = vmatpush.xpose.msra.mxu0 0.0
      %696 = vmatpush.xpose.msra.mxu0 0.0
      %v697 = vand.u32 %v628, 4294901760
      %v698 = vsub.f32 %v628, %v697
      %699 = vmatpush.xpose.msra.mxu0 %v698
      %v700 = vand.u32 %v626, 4294901760
      %v701 = vsub.f32 %v626, %v700
      %702 = vmatmul.f32.gmra.mxu0 %v701
      %v703 = vpop.f32.mrf.mxu0
      %v704 = vadd.f32 %v680, %v703
      %705 = vdwg.mxu0
      %706 = vmatpush.xpose.msra.mxu0 0.0
      %707 = vmatpush.xpose.msra.mxu0 0.0
      %708 = vmatpush.xpose.msra.mxu0 0.0
      %709 = vmatpush.xpose.msra.mxu0 0.0
      %710 = vmatpush.xpose.msra.mxu0 0.0
      %711 = vmatpush.xpose.msra.mxu0 0.0
      %712 = vmatpush.xpose.msra.mxu0 0.0
      %713 = vmatpush.xpose.msra.mxu0 0.0
      %714 = vmatpush.xpose.msra.mxu0 0.0
      %715 = vmatpush.xpose.msra.mxu0 0.0
      %716 = vmatpush.xpose.msra.mxu0 0.0
      %717 = vmatpush.xpose.msra.mxu0 0.0
      %718 = vmatpush.xpose.msra.mxu0 0.0
      %719 = vmatpush.xpose.msra.mxu0 0.0
      %720 = vmatpush.xpose.msra.mxu0 0.0
      %v721 = vand.u32 %v628, 4294901760
      %722 = vmatpush.xpose.msra.mxu0 %v721
      %v723 = vand.u32 %v626, 4294901760
      %v724 = vsub.f32 %v626, %v723
      %v725 = vand.u32 %v724, 4294901760
      %726 = vmatmul.f32.gmra.mxu0 %v725
      %v727 = vpop.f32.mrf.mxu0
      %v728 = vadd.f32 %v704, %v727
      %729 = vdwg.mxu0
      %730 = vmatpush.xpose.msra.mxu0 0.0
      %731 = vmatpush.xpose.msra.mxu0 0.0
      %732 = vmatpush.xpose.msra.mxu0 0.0
      %733 = vmatpush.xpose.msra.mxu0 0.0
      %734 = vmatpush.xpose.msra.mxu0 0.0
      %735 = vmatpush.xpose.msra.mxu0 0.0
      %736 = vmatpush.xpose.msra.mxu0 0.0
      %737 = vmatpush.xpose.msra.mxu0 0.0
      %738 = vmatpush.xpose.msra.mxu0 0.0
      %739 = vmatpush.xpose.msra.mxu0 0.0
      %740 = vmatpush.xpose.msra.mxu0 0.0
      %741 = vmatpush.xpose.msra.mxu0 0.0
      %742 = vmatpush.xpose.msra.mxu0 0.0
      %743 = vmatpush.xpose.msra.mxu0 0.0
      %744 = vmatpush.xpose.msra.mxu0 0.0
      %v745 = vand.u32 %v628, 4294901760
      %v746 = vsub.f32 %v628, %v745
      %v747 = vand.u32 %v746, 4294901760
      %748 = vmatpush.xpose.msra.mxu0 %v747
      %v749 = vand.u32 %v626, 4294901760
      %750 = vmatmul.f32.gmra.mxu0 %v749
      %v751 = vpop.f32.mrf.mxu0
      %v752 = vadd.f32 %v728, %v751
      %753 = vdwg.mxu0
      %754 = vmatpush.xpose.msra.mxu0 0.0
      %755 = vmatpush.xpose.msra.mxu0 0.0
      %756 = vmatpush.xpose.msra.mxu0 0.0
      %757 = vmatpush.xpose.msra.mxu0 0.0
      %758 = vmatpush.xpose.msra.mxu0 0.0
      %759 = vmatpush.xpose.msra.mxu0 0.0
      %760 = vmatpush.xpose.msra.mxu0 0.0
      %761 = vmatpush.xpose.msra.mxu0 0.0
      %762 = vmatpush.xpose.msra.mxu0 0.0
      %763 = vmatpush.xpose.msra.mxu0 0.0
      %764 = vmatpush.xpose.msra.mxu0 0.0
      %765 = vmatpush.xpose.msra.mxu0 0.0
      %766 = vmatpush.xpose.msra.mxu0 0.0
      %767 = vmatpush.xpose.msra.mxu0 0.0
      %768 = vmatpush.xpose.msra.mxu0 0.0
      %v769 = vand.u32 %v628, 4294901760
      %770 = vmatpush.xpose.msra.mxu0 %v769
      %v771 = vand.u32 %v626, 4294901760
      %772 = vmatmul.f32.gmra.mxu0 %v771
      %v773 = vpop.f32.mrf.mxu0
      %v774 = vadd.f32 %v752, %v773
      %775 = vdwg.mxu0
      %v776 = vsel %vm624, %v774, -inf
      %777 = vmax.xlane.f32.xlu0 %v776
      %v778 = vpop.xlane.xlu0 %777
      %v779 = vsub.f32 %v774, %v778
      %v780 = vmul.f32 %v779, 1.442695
      %v781 = vpow.pop %v780
      %v782 = vsel %vm624, %v781, 0.0
      %783 = vadd.xlane.f32.xlu0 %v782
      %v784 = vpop.xlane.xlu0 %783
      %v785 = vrcp.pop %v784
      %v786 = vmul.f32 %v784, %v785
      %v787 = vsub.f32 1.0, %v786
      %v788 = vmul.f32 %v785, %v787
      %v789 = vadd.f32 %v785, %v788
      %vm790 = vweird.f32 %v784
      %vm791 = vweird.f32 %v785
      %vm792 = vmor %vm790, %vm791
      %v793 = vsel %vm792, %v785, %v789
      %v794 = vand.u32 2147483647, %v784
      %vm795 = vcmp.eq.f32.partialorder %v794, 8.507059e+37
      %v796 = vand.u32 %v784, 2147483648
      %v797 = vor.u32 1.1754944e-38, %v796
      %v798 = vsel %vm795, %v797, %v793
      %v799 = vmul.f32 %v781, %v798
      %v801 = vsel %vm624, %v799, 0
      %803 = vmatpush.msra.mxu0 0.0
      %804 = vmatpush.msra.mxu0 0.0
      %805 = vmatpush.msra.mxu0 0.0
      %806 = vmatpush.msra.mxu0 0.0
      %807 = vmatpush.msra.mxu0 0.0
      %808 = vmatpush.msra.mxu0 0.0
      %809 = vmatpush.msra.mxu0 0.0
      %810 = vmatpush.msra.mxu0 0.0
      %811 = vmatpush.msra.mxu0 0.0
      %812 = vmatpush.msra.mxu0 0.0
      %813 = vmatpush.msra.mxu0 0.0
      %814 = vmatpush.msra.mxu0 0.0
      %815 = vmatpush.msra.mxu0 0.0
      %816 = vmatpush.msra.mxu0 0.0
      %817 = vmatpush.msra.mxu0 0.0
      %v818 = vand.u32 %v619, 4294901760
      %819 = vmatpush.msra.mxu0 %v818
      %v820 = vand.u32 %v801, 4294901760
      %v821 = vsub.f32 %v801, %v820
      %v822 = vand.u32 %v821, 4294901760
      %v823 = vsub.f32 %v821, %v822
      %v824 = vand.u32 %v823, 4294901760
      %825 = vmatmul.f32.gmra.mxu0 %v824
      %v826 = vpop.f32.mrf.mxu0
      %v827 = vadd.f32 0.0, %v826
      %828 = vdwg.mxu0
      %829 = vmatpush.msra.mxu0 0.0
      %830 = vmatpush.msra.mxu0 0.0
      %831 = vmatpush.msra.mxu0 0.0
      %832 = vmatpush.msra.mxu0 0.0
      %833 = vmatpush.msra.mxu0 0.0
      %834 = vmatpush.msra.mxu0 0.0
      %835 = vmatpush.msra.mxu0 0.0
      %836 = vmatpush.msra.mxu0 0.0
      %837 = vmatpush.msra.mxu0 0.0
      %838 = vmatpush.msra.mxu0 0.0
      %839 = vmatpush.msra.mxu0 0.0
      %840 = vmatpush.msra.mxu0 0.0
      %841 = vmatpush.msra.mxu0 0.0
      %842 = vmatpush.msra.mxu0 0.0
      %843 = vmatpush.msra.mxu0 0.0
      %v844 = vand.u32 %v619, 4294901760
      %v845 = vsub.f32 %v619, %v844
      %v846 = vand.u32 %v845, 4294901760
      %v847 = vsub.f32 %v845, %v846
      %v848 = vand.u32 %v847, 4294901760
      %849 = vmatpush.msra.mxu0 %v848
      %v850 = vand.u32 %v801, 4294901760
      %851 = vmatmul.f32.gmra.mxu0 %v850
      %v852 = vpop.f32.mrf.mxu0
      %v853 = vadd.f32 %v827, %v852
      %854 = vdwg.mxu0
      %855 = vmatpush.msra.mxu0 0.0
      %856 = vmatpush.msra.mxu0 0.0
      %857 = vmatpush.msra.mxu0 0.0
      %858 = vmatpush.msra.mxu0 0.0
      %859 = vmatpush.msra.mxu0 0.0
      %860 = vmatpush.msra.mxu0 0.0
      %861 = vmatpush.msra.mxu0 0.0
      %862 = vmatpush.msra.mxu0 0.0
      %863 = vmatpush.msra.mxu0 0.0
      %864 = vmatpush.msra.mxu0 0.0
      %865 = vmatpush.msra.mxu0 0.0
      %866 = vmatpush.msra.mxu0 0.0
      %867 = vmatpush.msra.mxu0 0.0
      %868 = vmatpush.msra.mxu0 0.0
      %869 = vmatpush.msra.mxu0 0.0
      %v870 = vand.u32 %v619, 4294901760
      %v871 = vsub.f32 %v619, %v870
      %872 = vmatpush.msra.mxu0 %v871
      %v873 = vand.u32 %v801, 4294901760
      %v874 = vsub.f32 %v801, %v873
      %875 = vmatmul.f32.gmra.mxu0 %v874
      %v876 = vpop.f32.mrf.mxu0
      %v877 = vadd.f32 %v853, %v876
      %878 = vdwg.mxu0
      %879 = vmatpush.msra.mxu0 0.0
      %880 = vmatpush.msra.mxu0 0.0
      %881 = vmatpush.msra.mxu0 0.0
      %882 = vmatpush.msra.mxu0 0.0
      %883 = vmatpush.msra.mxu0 0.0
      %884 = vmatpush.msra.mxu0 0.0
      %885 = vmatpush.msra.mxu0 0.0
      %886 = vmatpush.msra.mxu0 0.0
      %887 = vmatpush.msra.mxu0 0.0
      %888 = vmatpush.msra.mxu0 0.0
      %889 = vmatpush.msra.mxu0 0.0
      %890 = vmatpush.msra.mxu0 0.0
      %891 = vmatpush.msra.mxu0 0.0
      %892 = vmatpush.msra.mxu0 0.0
      %893 = vmatpush.msra.mxu0 0.0
      %v894 = vand.u32 %v619, 4294901760
      %895 = vmatpush.msra.mxu0 %v894
      %v896 = vand.u32 %v801, 4294901760
      %v897 = vsub.f32 %v801, %v896
      %v898 = vand.u32 %v897, 4294901760
      %899 = vmatmul.f32.gmra.mxu0 %v898
      %v900 = vpop.f32.mrf.mxu0
      %v901 = vadd.f32 %v877, %v900
      %902 = vdwg.mxu0
      %903 = vmatpush.msra.mxu0 0.0
      %904 = vmatpush.msra.mxu0 0.0
      %905 = vmatpush.msra.mxu0 0.0
      %906 = vmatpush.msra.mxu0 0.0
      %907 = vmatpush.msra.mxu0 0.0
      %908 = vmatpush.msra.mxu0 0.0
      %909 = vmatpush.msra.mxu0 0.0
      %910 = vmatpush.msra.mxu0 0.0
      %911 = vmatpush.msra.mxu0 0.0
      %912 = vmatpush.msra.mxu0 0.0
      %913 = vmatpush.msra.mxu0 0.0
      %914 = vmatpush.msra.mxu0 0.0
      %915 = vmatpush.msra.mxu0 0.0
      %916 = vmatpush.msra.mxu0 0.0
      %917 = vmatpush.msra.mxu0 0.0
      %v918 = vand.u32 %v619, 4294901760
      %v919 = vsub.f32 %v619, %v918
      %v920 = vand.u32 %v919, 4294901760
      %921 = vmatpush.msra.mxu0 %v920
      %v922 = vand.u32 %v801, 4294901760
      %923 = vmatmul.f32.gmra.mxu0 %v922
      %v924 = vpop.f32.mrf.mxu0
      %v925 = vadd.f32 %v901, %v924
      %926 = vdwg.mxu0
      %927 = vmatpush.msra.mxu0 0.0
      %928 = vmatpush.msra.mxu0 0.0
      %929 = vmatpush.msra.mxu0 0.0
      %930 = vmatpush.msra.mxu0 0.0
      %931 = vmatpush.msra.mxu0 0.0
      %932 = vmatpush.msra.mxu0 0.0
      %933 = vmatpush.msra.mxu0 0.0
      %934 = vmatpush.msra.mxu0 0.0
      %935 = vmatpush.msra.mxu0 0.0
      %936 = vmatpush.msra.mxu0 0.0
      %937 = vmatpush.msra.mxu0 0.0
      %938 = vmatpush.msra.mxu0 0.0
      %939 = vmatpush.msra.mxu0 0.0
      %940 = vmatpush.msra.mxu0 0.0
      %941 = vmatpush.msra.mxu0 0.0
      %v942 = vand.u32 %v619, 4294901760
      %943 = vmatpush.msra.mxu0 %v942
      %v944 = vand.u32 %v801, 4294901760
      %945 = vmatmul.f32.gmra.mxu0 %v944
      %v946 = vpop.f32.mrf.mxu0
      %v947 = vadd.f32 %v925, %v946
      %948 = vdwg.mxu0
      %949 = vrot.lane.b32.xlu0 %v409, 120
      %v950 = vpop.permute.xlu0 %949
      %951 = vrot.lane.b32.xlu0 %v415, 88
      %v952 = vpop.permute.xlu0 %951
      %v953 = vsel %vm624, %v950, 0
      %v955 = vsel %vm624, %v952, 0
      %957 = vmatpush.xpose.msra.mxu0 0.0
      %958 = vmatpush.xpose.msra.mxu0 0.0
      %959 = vmatpush.xpose.msra.mxu0 0.0
      %960 = vmatpush.xpose.msra.mxu0 0.0
      %961 = vmatpush.xpose.msra.mxu0 0.0
      %962 = vmatpush.xpose.msra.mxu0 0.0
      %963 = vmatpush.xpose.msra.mxu0 0.0
      %964 = vmatpush.xpose.msra.mxu0 0.0
      %965 = vmatpush.xpose.msra.mxu0 0.0
      %966 = vmatpush.xpose.msra.mxu0 0.0
      %967 = vmatpush.xpose.msra.mxu0 0.0
      %968 = vmatpush.xpose.msra.mxu0 0.0
      %969 = vmatpush.xpose.msra.mxu0 0.0
      %970 = vmatpush.xpose.msra.mxu0 0.0
      %971 = vmatpush.xpose.msra.mxu0 0.0
      %v972 = vand.u32 %v955, 4294901760
      %973 = vmatpush.xpose.msra.mxu0 %v972
      %v974 = vand.u32 %v953, 4294901760
      %v975 = vsub.f32 %v953, %v974
      %v976 = vand.u32 %v975, 4294901760
      %v977 = vsub.f32 %v975, %v976
      %v978 = vand.u32 %v977, 4294901760
      %979 = vmatmul.f32.gmra.mxu0 %v978
      %v980 = vpop.f32.mrf.mxu0
      %v981 = vadd.f32 0.0, %v980
      %982 = vdwg.mxu0
      %983 = vmatpush.xpose.msra.mxu0 0.0
      %984 = vmatpush.xpose.msra.mxu0 0.0
      %985 = vmatpush.xpose.msra.mxu0 0.0
      %986 = vmatpush.xpose.msra.mxu0 0.0
      %987 = vmatpush.xpose.msra.mxu0 0.0
      %988 = vmatpush.xpose.msra.mxu0 0.0
      %989 = vmatpush.xpose.msra.mxu0 0.0
      %990 = vmatpush.xpose.msra.mxu0 0.0
      %991 = vmatpush.xpose.msra.mxu0 0.0
      %992 = vmatpush.xpose.msra.mxu0 0.0
      %993 = vmatpush.xpose.msra.mxu0 0.0
      %994 = vmatpush.xpose.msra.mxu0 0.0
      %995 = vmatpush.xpose.msra.mxu0 0.0
      %996 = vmatpush.xpose.msra.mxu0 0.0
      %997 = vmatpush.xpose.msra.mxu0 0.0
      %v998 = vand.u32 %v955, 4294901760
      %v999 = vsub.f32 %v955, %v998
      %v1000 = vand.u32 %v999, 4294901760
      %v1001 = vsub.f32 %v999, %v1000
      %v1002 = vand.u32 %v1001, 4294901760
      %1003 = vmatpush.xpose.msra.mxu0 %v1002
      %v1004 = vand.u32 %v953, 4294901760
      %1005 = vmatmul.f32.gmra.mxu0 %v1004
      %v1006 = vpop.f32.mrf.mxu0
      %v1007 = vadd.f32 %v981, %v1006
      %1008 = vdwg.mxu0
      %1009 = vmatpush.xpose.msra.mxu0 0.0
      %1010 = vmatpush.xpose.msra.mxu0 0.0
      %1011 = vmatpush.xpose.msra.mxu0 0.0
      %1012 = vmatpush.xpose.msra.mxu0 0.0
      %1013 = vmatpush.xpose.msra.mxu0 0.0
      %1014 = vmatpush.xpose.msra.mxu0 0.0
      %1015 = vmatpush.xpose.msra.mxu0 0.0
      %1016 = vmatpush.xpose.msra.mxu0 0.0
      %1017 = vmatpush.xpose.msra.mxu0 0.0
      %1018 = vmatpush.xpose.msra.mxu0 0.0
      %1019 = vmatpush.xpose.msra.mxu0 0.0
      %1020 = vmatpush.xpose.msra.mxu0 0.0
      %1021 = vmatpush.xpose.msra.mxu0 0.0
      %1022 = vmatpush.xpose.msra.mxu0 0.0
      %1023 = vmatpush.xpose.msra.mxu0 0.0
      %v1024 = vand.u32 %v955, 4294901760
      %v1025 = vsub.f32 %v955, %v1024
      %1026 = vmatpush.xpose.msra.mxu0 %v1025
      %v1027 = vand.u32 %v953, 4294901760
      %v1028 = vsub.f32 %v953, %v1027
      %1029 = vmatmul.f32.gmra.mxu0 %v1028
      %v1030 = vpop.f32.mrf.mxu0
      %v1031 = vadd.f32 %v1007, %v1030
      %1032 = vdwg.mxu0
      %1033 = vmatpush.xpose.msra.mxu0 0.0
      %1034 = vmatpush.xpose.msra.mxu0 0.0
      %1035 = vmatpush.xpose.msra.mxu0 0.0
      %1036 = vmatpush.xpose.msra.mxu0 0.0
      %1037 = vmatpush.xpose.msra.mxu0 0.0
      %1038 = vmatpush.xpose.msra.mxu0 0.0
      %1039 = vmatpush.xpose.msra.mxu0 0.0
      %1040 = vmatpush.xpose.msra.mxu0 0.0
      %1041 = vmatpush.xpose.msra.mxu0 0.0
      %1042 = vmatpush.xpose.msra.mxu0 0.0
      %1043 = vmatpush.xpose.msra.mxu0 0.0
      %1044 = vmatpush.xpose.msra.mxu0 0.0
      %1045 = vmatpush.xpose.msra.mxu0 0.0
      %1046 = vmatpush.xpose.msra.mxu0 0.0
      %1047 = vmatpush.xpose.msra.mxu0 0.0
      %v1048 = vand.u32 %v955, 4294901760
      %1049 = vmatpush.xpose.msra.mxu0 %v1048
      %v1050 = vand.u32 %v953, 4294901760
      %v1051 = vsub.f32 %v953, %v1050
      %v1052 = vand.u32 %v1051, 4294901760
      %1053 = vmatmul.f32.gmra.mxu0 %v1052
      %v1054 = vpop.f32.mrf.mxu0
      %v1055 = vadd.f32 %v1031, %v1054
      %1056 = vdwg.mxu0
      %1057 = vmatpush.xpose.msra.mxu0 0.0
      %1058 = vmatpush.xpose.msra.mxu0 0.0
      %1059 = vmatpush.xpose.msra.mxu0 0.0
      %1060 = vmatpush.xpose.msra.mxu0 0.0
      %1061 = vmatpush.xpose.msra.mxu0 0.0
      %1062 = vmatpush.xpose.msra.mxu0 0.0
      %1063 = vmatpush.xpose.msra.mxu0 0.0
      %1064 = vmatpush.xpose.msra.mxu0 0.0
      %1065 = vmatpush.xpose.msra.mxu0 0.0
      %1066 = vmatpush.xpose.msra.mxu0 0.0
      %1067 = vmatpush.xpose.msra.mxu0 0.0
      %1068 = vmatpush.xpose.msra.mxu0 0.0
      %1069 = vmatpush.xpose.msra.mxu0 0.0
      %1070 = vmatpush.xpose.msra.mxu0 0.0
      %1071 = vmatpush.xpose.msra.mxu0 0.0
      %v1072 = vand.u32 %v955, 4294901760
      %v1073 = vsub.f32 %v955, %v1072
      %v1074 = vand.u32 %v1073, 4294901760
      %1075 = vmatpush.xpose.msra.mxu0 %v1074
      %v1076 = vand.u32 %v953, 4294901760
      %1077 = vmatmul.f32.gmra.mxu0 %v1076
      %v1078 = vpop.f32.mrf.mxu0
      %v1079 = vadd.f32 %v1055, %v1078
      %1080 = vdwg.mxu0
      %1081 = vmatpush.xpose.msra.mxu0 0.0
      %1082 = vmatpush.xpose.msra.mxu0 0.0
      %1083 = vmatpush.xpose.msra.mxu0 0.0
      %1084 = vmatpush.xpose.msra.mxu0 0.0
      %1085 = vmatpush.xpose.msra.mxu0 0.0
      %1086 = vmatpush.xpose.msra.mxu0 0.0
      %1087 = vmatpush.xpose.msra.mxu0 0.0
      %1088 = vmatpush.xpose.msra.mxu0 0.0
      %1089 = vmatpush.xpose.msra.mxu0 0.0
      %1090 = vmatpush.xpose.msra.mxu0 0.0
      %1091 = vmatpush.xpose.msra.mxu0 0.0
      %1092 = vmatpush.xpose.msra.mxu0 0.0
      %1093 = vmatpush.xpose.msra.mxu0 0.0
      %1094 = vmatpush.xpose.msra.mxu0 0.0
      %1095 = vmatpush.xpose.msra.mxu0 0.0
      %v1096 = vand.u32 %v955, 4294901760
      %1097 = vmatpush.xpose.msra.mxu0 %v1096
      %v1098 = vand.u32 %v953, 4294901760
      %1099 = vmatmul.f32.gmra.mxu0 %v1098
      %v1100 = vpop.f32.mrf.mxu0
      %v1101 = vadd.f32 %v1079, %v1100
      %1102 = vdwg.mxu0
      %v1103 = vsel %vm624, %v1101, -inf
      %1104 = vmax.xlane.f32.xlu0 %v1103
      %v1105 = vpop.xlane.xlu0 %1104
      %v1106 = vsub.f32 %v1101, %v1105
      %v1107 = vmul.f32 %v1106, 1.442695
      %v1108 = vpow.pop %v1107
      %v1109 = vsel %vm624, %v1108, 0.0
      %1110 = vadd.xlane.f32.xlu0 %v1109
      %v1111 = vpop.xlane.xlu0 %1110
      %v1112 = vrcp.pop %v1111
      %v1113 = vmul.f32 %v1111, %v1112
      %v1114 = vsub.f32 1.0, %v1113
      %v1115 = vmul.f32 %v1112, %v1114
      %v1116 = vadd.f32 %v1112, %v1115
      %vm1117 = vweird.f32 %v1111
      %vm1118 = vweird.f32 %v1112
      %vm1119 = vmor %vm1117, %vm1118
      %v1120 = vsel %vm1119, %v1112, %v1116
      %v1121 = vand.u32 2147483647, %v1111
      %vm1122 = vcmp.eq.f32.partialorder %v1121, 8.507059e+37
      %v1123 = vand.u32 %v1111, 2147483648
      %v1124 = vor.u32 1.1754944e-38, %v1123
      %v1125 = vsel %vm1122, %v1124, %v1120
      %v1126 = vmul.f32 %v1108, %v1125
      %1128 = vrot.lane.b32.xlu0 %v619, 120
      %v1129 = vpop.permute.xlu0 %1128
      %v1132 = vsel %vm624, %v1126, 0
      %1134 = vmatpush.msra.mxu0 0.0
      %1135 = vmatpush.msra.mxu0 0.0
      %1136 = vmatpush.msra.mxu0 0.0
      %1137 = vmatpush.msra.mxu0 0.0
      %1138 = vmatpush.msra.mxu0 0.0
      %1139 = vmatpush.msra.mxu0 0.0
      %1140 = vmatpush.msra.mxu0 0.0
      %1141 = vmatpush.msra.mxu0 0.0
      %1142 = vmatpush.msra.mxu0 0.0
      %1143 = vmatpush.msra.mxu0 0.0
      %1144 = vmatpush.msra.mxu0 0.0
      %1145 = vmatpush.msra.mxu0 0.0
      %1146 = vmatpush.msra.mxu0 0.0
      %1147 = vmatpush.msra.mxu0 0.0
      %1148 = vmatpush.msra.mxu0 0.0
      %v1149 = vand.u32 %v1129, 4294901760
      %1150 = vmatpush.msra.mxu0 %v1149
      %v1151 = vand.u32 %v1132, 4294901760
      %v1152 = vsub.f32 %v1132, %v1151
      %v1153 = vand.u32 %v1152, 4294901760
      %v1154 = vsub.f32 %v1152, %v1153
      %v1155 = vand.u32 %v1154, 4294901760
      %1156 = vmatmul.f32.gmra.mxu0 %v1155
      %v1157 = vpop.f32.mrf.mxu0
      %v1158 = vadd.f32 0.0, %v1157
      %1159 = vdwg.mxu0
      %1160 = vmatpush.msra.mxu0 0.0
      %1161 = vmatpush.msra.mxu0 0.0
      %1162 = vmatpush.msra.mxu0 0.0
      %1163 = vmatpush.msra.mxu0 0.0
      %1164 = vmatpush.msra.mxu0 0.0
      %1165 = vmatpush.msra.mxu0 0.0
      %1166 = vmatpush.msra.mxu0 0.0
      %1167 = vmatpush.msra.mxu0 0.0
      %1168 = vmatpush.msra.mxu0 0.0
      %1169 = vmatpush.msra.mxu0 0.0
      %1170 = vmatpush.msra.mxu0 0.0
      %1171 = vmatpush.msra.mxu0 0.0
      %1172 = vmatpush.msra.mxu0 0.0
      %1173 = vmatpush.msra.mxu0 0.0
      %1174 = vmatpush.msra.mxu0 0.0
      %v1175 = vand.u32 %v1129, 4294901760
      %v1176 = vsub.f32 %v1129, %v1175
      %v1177 = vand.u32 %v1176, 4294901760
      %v1178 = vsub.f32 %v1176, %v1177
      %v1179 = vand.u32 %v1178, 4294901760
      %1180 = vmatpush.msra.mxu0 %v1179
      %v1181 = vand.u32 %v1132, 4294901760
      %1182 = vmatmul.f32.gmra.mxu0 %v1181
      %v1183 = vpop.f32.mrf.mxu0
      %v1184 = vadd.f32 %v1158, %v1183
      %1185 = vdwg.mxu0
      %1186 = vmatpush.msra.mxu0 0.0
      %1187 = vmatpush.msra.mxu0 0.0
      %1188 = vmatpush.msra.mxu0 0.0
      %1189 = vmatpush.msra.mxu0 0.0
      %1190 = vmatpush.msra.mxu0 0.0
      %1191 = vmatpush.msra.mxu0 0.0
      %1192 = vmatpush.msra.mxu0 0.0
      %1193 = vmatpush.msra.mxu0 0.0
      %1194 = vmatpush.msra.mxu0 0.0
      %1195 = vmatpush.msra.mxu0 0.0
      %1196 = vmatpush.msra.mxu0 0.0
      %1197 = vmatpush.msra.mxu0 0.0
      %1198 = vmatpush.msra.mxu0 0.0
      %1199 = vmatpush.msra.mxu0 0.0
      %1200 = vmatpush.msra.mxu0 0.0
      %v1201 = vand.u32 %v1129, 4294901760
      %v1202 = vsub.f32 %v1129, %v1201
      %1203 = vmatpush.msra.mxu0 %v1202
      %v1204 = vand.u32 %v1132, 4294901760
      %v1205 = vsub.f32 %v1132, %v1204
      %1206 = vmatmul.f32.gmra.mxu0 %v1205
      %v1207 = vpop.f32.mrf.mxu0
      %v1208 = vadd.f32 %v1184, %v1207
      %1209 = vdwg.mxu0
      %1210 = vmatpush.msra.mxu0 0.0
      %1211 = vmatpush.msra.mxu0 0.0
      %1212 = vmatpush.msra.mxu0 0.0
      %1213 = vmatpush.msra.mxu0 0.0
      %1214 = vmatpush.msra.mxu0 0.0
      %1215 = vmatpush.msra.mxu0 0.0
      %1216 = vmatpush.msra.mxu0 0.0
      %1217 = vmatpush.msra.mxu0 0.0
      %1218 = vmatpush.msra.mxu0 0.0
      %1219 = vmatpush.msra.mxu0 0.0
      %1220 = vmatpush.msra.mxu0 0.0
      %1221 = vmatpush.msra.mxu0 0.0
      %1222 = vmatpush.msra.mxu0 0.0
      %1223 = vmatpush.msra.mxu0 0.0
      %1224 = vmatpush.msra.mxu0 0.0
      %v1225 = vand.u32 %v1129, 4294901760
      %1226 = vmatpush.msra.mxu0 %v1225
      %v1227 = vand.u32 %v1132, 4294901760
      %v1228 = vsub.f32 %v1132, %v1227
      %v1229 = vand.u32 %v1228, 4294901760
      %1230 = vmatmul.f32.gmra.mxu0 %v1229
      %v1231 = vpop.f32.mrf.mxu0
      %v1232 = vadd.f32 %v1208, %v1231
      %1233 = vdwg.mxu0
      %1234 = vmatpush.msra.mxu0 0.0
      %1235 = vmatpush.msra.mxu0 0.0
      %1236 = vmatpush.msra.mxu0 0.0
      %1237 = vmatpush.msra.mxu0 0.0
      %1238 = vmatpush.msra.mxu0 0.0
      %1239 = vmatpush.msra.mxu0 0.0
      %1240 = vmatpush.msra.mxu0 0.0
      %1241 = vmatpush.msra.mxu0 0.0
      %1242 = vmatpush.msra.mxu0 0.0
      %1243 = vmatpush.msra.mxu0 0.0
      %1244 = vmatpush.msra.mxu0 0.0
      %1245 = vmatpush.msra.mxu0 0.0
      %1246 = vmatpush.msra.mxu0 0.0
      %1247 = vmatpush.msra.mxu0 0.0
      %1248 = vmatpush.msra.mxu0 0.0
      %v1249 = vand.u32 %v1129, 4294901760
      %v1250 = vsub.f32 %v1129, %v1249
      %v1251 = vand.u32 %v1250, 4294901760
      %1252 = vmatpush.msra.mxu0 %v1251
      %v1253 = vand.u32 %v1132, 4294901760
      %1254 = vmatmul.f32.gmra.mxu0 %v1253
      %v1255 = vpop.f32.mrf.mxu0
      %v1256 = vadd.f32 %v1232, %v1255
      %1257 = vdwg.mxu0
      %1258 = vmatpush.msra.mxu0 0.0
      %1259 = vmatpush.msra.mxu0 0.0
      %1260 = vmatpush.msra.mxu0 0.0
      %1261 = vmatpush.msra.mxu0 0.0
      %1262 = vmatpush.msra.mxu0 0.0
      %1263 = vmatpush.msra.mxu0 0.0
      %1264 = vmatpush.msra.mxu0 0.0
      %1265 = vmatpush.msra.mxu0 0.0
      %1266 = vmatpush.msra.mxu0 0.0
      %1267 = vmatpush.msra.mxu0 0.0
      %1268 = vmatpush.msra.mxu0 0.0
      %1269 = vmatpush.msra.mxu0 0.0
      %1270 = vmatpush.msra.mxu0 0.0
      %1271 = vmatpush.msra.mxu0 0.0
      %1272 = vmatpush.msra.mxu0 0.0
      %v1273 = vand.u32 %v1129, 4294901760
      %1274 = vmatpush.msra.mxu0 %v1273
      %v1275 = vand.u32 %v1132, 4294901760
      %1276 = vmatmul.f32.gmra.mxu0 %v1275
      %v1277 = vpop.f32.mrf.mxu0
      %v1278 = vadd.f32 %v1256, %v1277
      %1279 = vdwg.mxu0
      %1280 = vrot.lane.b32.xlu0 %v409, 112
      %v1281 = vpop.permute.xlu0 %1280
      %1282 = vrot.lane.b32.xlu0 %v415, 80
      %v1283 = vpop.permute.xlu0 %1282
      %v1284 = vsel %vm624, %v1281, 0
      %v1286 = vsel %vm624, %v1283, 0
      %1288 = vmatpush.xpose.msra.mxu0 0.0
      %1289 = vmatpush.xpose.msra.mxu0 0.0
      %1290 = vmatpush.xpose.msra.mxu0 0.0
      %1291 = vmatpush.xpose.msra.mxu0 0.0
      %1292 = vmatpush.xpose.msra.mxu0 0.0
      %1293 = vmatpush.xpose.msra.mxu0 0.0
      %1294 = vmatpush.xpose.msra.mxu0 0.0
      %1295 = vmatpush.xpose.msra.mxu0 0.0
      %1296 = vmatpush.xpose.msra.mxu0 0.0
      %1297 = vmatpush.xpose.msra.mxu0 0.0
      %1298 = vmatpush.xpose.msra.mxu0 0.0
      %1299 = vmatpush.xpose.msra.mxu0 0.0
      %1300 = vmatpush.xpose.msra.mxu0 0.0
      %1301 = vmatpush.xpose.msra.mxu0 0.0
      %1302 = vmatpush.xpose.msra.mxu0 0.0
      %v1303 = vand.u32 %v1286, 4294901760
      %1304 = vmatpush.xpose.msra.mxu0 %v1303
      %v1305 = vand.u32 %v1284, 4294901760
      %v1306 = vsub.f32 %v1284, %v1305
      %v1307 = vand.u32 %v1306, 4294901760
      %v1308 = vsub.f32 %v1306, %v1307
      %v1309 = vand.u32 %v1308, 4294901760
      %1310 = vmatmul.f32.gmra.mxu0 %v1309
      %v1311 = vpop.f32.mrf.mxu0
      %v1312 = vadd.f32 0.0, %v1311
      %1313 = vdwg.mxu0
      %1314 = vmatpush.xpose.msra.mxu0 0.0
      %1315 = vmatpush.xpose.msra.mxu0 0.0
      %1316 = vmatpush.xpose.msra.mxu0 0.0
      %1317 = vmatpush.xpose.msra.mxu0 0.0
      %1318 = vmatpush.xpose.msra.mxu0 0.0
      %1319 = vmatpush.xpose.msra.mxu0 0.0
      %1320 = vmatpush.xpose.msra.mxu0 0.0
      %1321 = vmatpush.xpose.msra.mxu0 0.0
      %1322 = vmatpush.xpose.msra.mxu0 0.0
      %1323 = vmatpush.xpose.msra.mxu0 0.0
      %1324 = vmatpush.xpose.msra.mxu0 0.0
      %1325 = vmatpush.xpose.msra.mxu0 0.0
      %1326 = vmatpush.xpose.msra.mxu0 0.0
      %1327 = vmatpush.xpose.msra.mxu0 0.0
      %1328 = vmatpush.xpose.msra.mxu0 0.0
      %v1329 = vand.u32 %v1286, 4294901760
      %v1330 = vsub.f32 %v1286, %v1329
      %v1331 = vand.u32 %v1330, 4294901760
      %v1332 = vsub.f32 %v1330, %v1331
      %v1333 = vand.u32 %v1332, 4294901760
      %1334 = vmatpush.xpose.msra.mxu0 %v1333
      %v1335 = vand.u32 %v1284, 4294901760
      %1336 = vmatmul.f32.gmra.mxu0 %v1335
      %v1337 = vpop.f32.mrf.mxu0
      %v1338 = vadd.f32 %v1312, %v1337
      %1339 = vdwg.mxu0
      %1340 = vmatpush.xpose.msra.mxu0 0.0
      %1341 = vmatpush.xpose.msra.mxu0 0.0
      %1342 = vmatpush.xpose.msra.mxu0 0.0
      %1343 = vmatpush.xpose.msra.mxu0 0.0
      %1344 = vmatpush.xpose.msra.mxu0 0.0
      %1345 = vmatpush.xpose.msra.mxu0 0.0
      %1346 = vmatpush.xpose.msra.mxu0 0.0
      %1347 = vmatpush.xpose.msra.mxu0 0.0
      %1348 = vmatpush.xpose.msra.mxu0 0.0
      %1349 = vmatpush.xpose.msra.mxu0 0.0
      %1350 = vmatpush.xpose.msra.mxu0 0.0
      %1351 = vmatpush.xpose.msra.mxu0 0.0
      %1352 = vmatpush.xpose.msra.mxu0 0.0
      %1353 = vmatpush.xpose.msra.mxu0 0.0
      %1354 = vmatpush.xpose.msra.mxu0 0.0
      %v1355 = vand.u32 %v1286, 4294901760
      %v1356 = vsub.f32 %v1286, %v1355
      %1357 = vmatpush.xpose.msra.mxu0 %v1356
      %v1358 = vand.u32 %v1284, 4294901760
      %v1359 = vsub.f32 %v1284, %v1358
      %1360 = vmatmul.f32.gmra.mxu0 %v1359
      %v1361 = vpop.f32.mrf.mxu0
      %v1362 = vadd.f32 %v1338, %v1361
      %1363 = vdwg.mxu0
      %1364 = vmatpush.xpose.msra.mxu0 0.0
      %1365 = vmatpush.xpose.msra.mxu0 0.0
      %1366 = vmatpush.xpose.msra.mxu0 0.0
      %1367 = vmatpush.xpose.msra.mxu0 0.0
      %1368 = vmatpush.xpose.msra.mxu0 0.0
      %1369 = vmatpush.xpose.msra.mxu0 0.0
      %1370 = vmatpush.xpose.msra.mxu0 0.0
      %1371 = vmatpush.xpose.msra.mxu0 0.0
      %1372 = vmatpush.xpose.msra.mxu0 0.0
      %1373 = vmatpush.xpose.msra.mxu0 0.0
      %1374 = vmatpush.xpose.msra.mxu0 0.0
      %1375 = vmatpush.xpose.msra.mxu0 0.0
      %1376 = vmatpush.xpose.msra.mxu0 0.0
      %1377 = vmatpush.xpose.msra.mxu0 0.0
      %1378 = vmatpush.xpose.msra.mxu0 0.0
      %v1379 = vand.u32 %v1286, 4294901760
      %1380 = vmatpush.xpose.msra.mxu0 %v1379
      %v1381 = vand.u32 %v1284, 4294901760
      %v1382 = vsub.f32 %v1284, %v1381
      %v1383 = vand.u32 %v1382, 4294901760
      %1384 = vmatmul.f32.gmra.mxu0 %v1383
      %v1385 = vpop.f32.mrf.mxu0
      %v1386 = vadd.f32 %v1362, %v1385
      %1387 = vdwg.mxu0
      %1388 = vmatpush.xpose.msra.mxu0 0.0
      %1389 = vmatpush.xpose.msra.mxu0 0.0
      %1390 = vmatpush.xpose.msra.mxu0 0.0
      %1391 = vmatpush.xpose.msra.mxu0 0.0
      %1392 = vmatpush.xpose.msra.mxu0 0.0
      %1393 = vmatpush.xpose.msra.mxu0 0.0
      %1394 = vmatpush.xpose.msra.mxu0 0.0
      %1395 = vmatpush.xpose.msra.mxu0 0.0
      %1396 = vmatpush.xpose.msra.mxu0 0.0
      %1397 = vmatpush.xpose.msra.mxu0 0.0
      %1398 = vmatpush.xpose.msra.mxu0 0.0
      %1399 = vmatpush.xpose.msra.mxu0 0.0
      %1400 = vmatpush.xpose.msra.mxu0 0.0
      %1401 = vmatpush.xpose.msra.mxu0 0.0
      %1402 = vmatpush.xpose.msra.mxu0 0.0
      %v1403 = vand.u32 %v1286, 4294901760
      %v1404 = vsub.f32 %v1286, %v1403
      %v1405 = vand.u32 %v1404, 4294901760
      %1406 = vmatpush.xpose.msra.mxu0 %v1405
      %v1407 = vand.u32 %v1284, 4294901760
      %1408 = vmatmul.f32.gmra.mxu0 %v1407
      %v1409 = vpop.f32.mrf.mxu0
      %v1410 = vadd.f32 %v1386, %v1409
      %1411 = vdwg.mxu0
      %1412 = vmatpush.xpose.msra.mxu0 0.0
      %1413 = vmatpush.xpose.msra.mxu0 0.0
      %1414 = vmatpush.xpose.msra.mxu0 0.0
      %1415 = vmatpush.xpose.msra.mxu0 0.0
      %1416 = vmatpush.xpose.msra.mxu0 0.0
      %1417 = vmatpush.xpose.msra.mxu0 0.0
      %1418 = vmatpush.xpose.msra.mxu0 0.0
      %1419 = vmatpush.xpose.msra.mxu0 0.0
      %1420 = vmatpush.xpose.msra.mxu0 0.0
      %1421 = vmatpush.xpose.msra.mxu0 0.0
      %1422 = vmatpush.xpose.msra.mxu0 0.0
      %1423 = vmatpush.xpose.msra.mxu0 0.0
      %1424 = vmatpush.xpose.msra.mxu0 0.0
      %1425 = vmatpush.xpose.msra.mxu0 0.0
      %1426 = vmatpush.xpose.msra.mxu0 0.0
      %v1427 = vand.u32 %v1286, 4294901760
      %1428 = vmatpush.xpose.msra.mxu0 %v1427
      %v1429 = vand.u32 %v1284, 4294901760
      %1430 = vmatmul.f32.gmra.mxu0 %v1429
      %v1431 = vpop.f32.mrf.mxu0
      %v1432 = vadd.f32 %v1410, %v1431
      %1433 = vdwg.mxu0
      %v1434 = vsel %vm624, %v1432, -inf
      %1435 = vmax.xlane.f32.xlu0 %v1434
      %v1436 = vpop.xlane.xlu0 %1435
      %v1437 = vsub.f32 %v1432, %v1436
      %v1438 = vmul.f32 %v1437, 1.442695
      %v1439 = vpow.pop %v1438
      %v1440 = vsel %vm624, %v1439, 0.0
      %1441 = vadd.xlane.f32.xlu0 %v1440
      %v1442 = vpop.xlane.xlu0 %1441
      %v1443 = vrcp.pop %v1442
      %v1444 = vmul.f32 %v1442, %v1443
      %v1445 = vsub.f32 1.0, %v1444
      %v1446 = vmul.f32 %v1443, %v1445
      %v1447 = vadd.f32 %v1443, %v1446
      %vm1448 = vweird.f32 %v1442
      %vm1449 = vweird.f32 %v1443
      %vm1450 = vmor %vm1448, %vm1449
      %v1451 = vsel %vm1450, %v1443, %v1447
      %v1452 = vand.u32 2147483647, %v1442
      %vm1453 = vcmp.eq.f32.partialorder %v1452, 8.507059e+37
      %v1454 = vand.u32 %v1442, 2147483648
      %v1455 = vor.u32 1.1754944e-38, %v1454
      %v1456 = vsel %vm1453, %v1455, %v1451
      %v1457 = vmul.f32 %v1439, %v1456
      %1458 = vrot.lane.b32.xlu0 %v619, 112
      %v1459 = vpop.permute.xlu0 %1458
      %v1462 = vsel %vm624, %v1457, 0
      %1464 = vmatpush.msra.mxu0 0.0
      %1465 = vmatpush.msra.mxu0 0.0
      %1466 = vmatpush.msra.mxu0 0.0
      %1467 = vmatpush.msra.mxu0 0.0
      %1468 = vmatpush.msra.mxu0 0.0
      %1469 = vmatpush.msra.mxu0 0.0
      %1470 = vmatpush.msra.mxu0 0.0
      %1471 = vmatpush.msra.mxu0 0.0
      %1472 = vmatpush.msra.mxu0 0.0
      %1473 = vmatpush.msra.mxu0 0.0
      %1474 = vmatpush.msra.mxu0 0.0
      %1475 = vmatpush.msra.mxu0 0.0
      %1476 = vmatpush.msra.mxu0 0.0
      %1477 = vmatpush.msra.mxu0 0.0
      %1478 = vmatpush.msra.mxu0 0.0
      %v1479 = vand.u32 %v1459, 4294901760
      %1480 = vmatpush.msra.mxu0 %v1479
      %v1481 = vand.u32 %v1462, 4294901760
      %v1482 = vsub.f32 %v1462, %v1481
      %v1483 = vand.u32 %v1482, 4294901760
      %v1484 = vsub.f32 %v1482, %v1483
      %v1485 = vand.u32 %v1484, 4294901760
      %1486 = vmatmul.f32.gmra.mxu0 %v1485
      %v1487 = vpop.f32.mrf.mxu0
      %v1488 = vadd.f32 0.0, %v1487
      %1489 = vdwg.mxu0
      %1490 = vmatpush.msra.mxu0 0.0
      %1491 = vmatpush.msra.mxu0 0.0
      %1492 = vmatpush.msra.mxu0 0.0
      %1493 = vmatpush.msra.mxu0 0.0
      %1494 = vmatpush.msra.mxu0 0.0
      %1495 = vmatpush.msra.mxu0 0.0
      %1496 = vmatpush.msra.mxu0 0.0
      %1497 = vmatpush.msra.mxu0 0.0
      %1498 = vmatpush.msra.mxu0 0.0
      %1499 = vmatpush.msra.mxu0 0.0
      %1500 = vmatpush.msra.mxu0 0.0
      %1501 = vmatpush.msra.mxu0 0.0
      %1502 = vmatpush.msra.mxu0 0.0
      %1503 = vmatpush.msra.mxu0 0.0
      %1504 = vmatpush.msra.mxu0 0.0
      %v1505 = vand.u32 %v1459, 4294901760
      %v1506 = vsub.f32 %v1459, %v1505
      %v1507 = vand.u32 %v1506, 4294901760
      %v1508 = vsub.f32 %v1506, %v1507
      %v1509 = vand.u32 %v1508, 4294901760
      %1510 = vmatpush.msra.mxu0 %v1509
      %v1511 = vand.u32 %v1462, 4294901760
      %1512 = vmatmul.f32.gmra.mxu0 %v1511
      %v1513 = vpop.f32.mrf.mxu0
      %v1514 = vadd.f32 %v1488, %v1513
      %1515 = vdwg.mxu0
      %1516 = vmatpush.msra.mxu0 0.0
      %1517 = vmatpush.msra.mxu0 0.0
      %1518 = vmatpush.msra.mxu0 0.0
      %1519 = vmatpush.msra.mxu0 0.0
      %1520 = vmatpush.msra.mxu0 0.0
      %1521 = vmatpush.msra.mxu0 0.0
      %1522 = vmatpush.msra.mxu0 0.0
      %1523 = vmatpush.msra.mxu0 0.0
      %1524 = vmatpush.msra.mxu0 0.0
      %1525 = vmatpush.msra.mxu0 0.0
      %1526 = vmatpush.msra.mxu0 0.0
      %1527 = vmatpush.msra.mxu0 0.0
      %1528 = vmatpush.msra.mxu0 0.0
      %1529 = vmatpush.msra.mxu0 0.0
      %1530 = vmatpush.msra.mxu0 0.0
      %v1531 = vand.u32 %v1459, 4294901760
      %v1532 = vsub.f32 %v1459, %v1531
      %1533 = vmatpush.msra.mxu0 %v1532
      %v1534 = vand.u32 %v1462, 4294901760
      %v1535 = vsub.f32 %v1462, %v1534
      %1536 = vmatmul.f32.gmra.mxu0 %v1535
      %v1537 = vpop.f32.mrf.mxu0
      %v1538 = vadd.f32 %v1514, %v1537
      %1539 = vdwg.mxu0
      %1540 = vmatpush.msra.mxu0 0.0
      %1541 = vmatpush.msra.mxu0 0.0
      %1542 = vmatpush.msra.mxu0 0.0
      %1543 = vmatpush.msra.mxu0 0.0
      %1544 = vmatpush.msra.mxu0 0.0
      %1545 = vmatpush.msra.mxu0 0.0
      %1546 = vmatpush.msra.mxu0 0.0
      %1547 = vmatpush.msra.mxu0 0.0
      %1548 = vmatpush.msra.mxu0 0.0
      %1549 = vmatpush.msra.mxu0 0.0
      %1550 = vmatpush.msra.mxu0 0.0
      %1551 = vmatpush.msra.mxu0 0.0
      %1552 = vmatpush.msra.mxu0 0.0
      %1553 = vmatpush.msra.mxu0 0.0
      %1554 = vmatpush.msra.mxu0 0.0
      %v1555 = vand.u32 %v1459, 4294901760
      %1556 = vmatpush.msra.mxu0 %v1555
      %v1557 = vand.u32 %v1462, 4294901760
      %v1558 = vsub.f32 %v1462, %v1557
      %v1559 = vand.u32 %v1558, 4294901760
      %1560 = vmatmul.f32.gmra.mxu0 %v1559
      %v1561 = vpop.f32.mrf.mxu0
      %v1562 = vadd.f32 %v1538, %v1561
      %1563 = vdwg.mxu0
      %1564 = vmatpush.msra.mxu0 0.0
      %1565 = vmatpush.msra.mxu0 0.0
      %1566 = vmatpush.msra.mxu0 0.0
      %1567 = vmatpush.msra.mxu0 0.0
      %1568 = vmatpush.msra.mxu0 0.0
      %1569 = vmatpush.msra.mxu0 0.0
      %1570 = vmatpush.msra.mxu0 0.0
      %1571 = vmatpush.msra.mxu0 0.0
      %1572 = vmatpush.msra.mxu0 0.0
      %1573 = vmatpush.msra.mxu0 0.0
      %1574 = vmatpush.msra.mxu0 0.0
      %1575 = vmatpush.msra.mxu0 0.0
      %1576 = vmatpush.msra.mxu0 0.0
      %1577 = vmatpush.msra.mxu0 0.0
      %1578 = vmatpush.msra.mxu0 0.0
      %v1579 = vand.u32 %v1459, 4294901760
      %v1580 = vsub.f32 %v1459, %v1579
      %v1581 = vand.u32 %v1580, 4294901760
      %1582 = vmatpush.msra.mxu0 %v1581
      %v1583 = vand.u32 %v1462, 4294901760
      %1584 = vmatmul.f32.gmra.mxu0 %v1583
      %v1585 = vpop.f32.mrf.mxu0
      %v1586 = vadd.f32 %v1562, %v1585
      %1587 = vdwg.mxu0
      %1588 = vmatpush.msra.mxu0 0.0
      %1589 = vmatpush.msra.mxu0 0.0
      %1590 = vmatpush.msra.mxu0 0.0
      %1591 = vmatpush.msra.mxu0 0.0
      %1592 = vmatpush.msra.mxu0 0.0
      %1593 = vmatpush.msra.mxu0 0.0
      %1594 = vmatpush.msra.mxu0 0.0
      %1595 = vmatpush.msra.mxu0 0.0
      %1596 = vmatpush.msra.mxu0 0.0
      %1597 = vmatpush.msra.mxu0 0.0
      %1598 = vmatpush.msra.mxu0 0.0
      %1599 = vmatpush.msra.mxu0 0.0
      %1600 = vmatpush.msra.mxu0 0.0
      %1601 = vmatpush.msra.mxu0 0.0
      %1602 = vmatpush.msra.mxu0 0.0
      %v1603 = vand.u32 %v1459, 4294901760
      %1604 = vmatpush.msra.mxu0 %v1603
      %v1605 = vand.u32 %v1462, 4294901760
      %1606 = vmatmul.f32.gmra.mxu0 %v1605
      %v1607 = vpop.f32.mrf.mxu0
      %v1608 = vadd.f32 %v1586, %v1607
      %1609 = vdwg.mxu0
      %1610 = vrot.lane.b32.xlu0 %v409, 104
      %v1611 = vpop.permute.xlu0 %1610
      %1612 = vrot.lane.b32.xlu0 %v415, 72
      %v1613 = vpop.permute.xlu0 %1612
      %v1614 = vsel %vm624, %v1611, 0
      %v1616 = vsel %vm624, %v1613, 0
      %1618 = vmatpush.xpose.msra.mxu0 0.0
      %1619 = vmatpush.xpose.msra.mxu0 0.0
      %1620 = vmatpush.xpose.msra.mxu0 0.0
      %1621 = vmatpush.xpose.msra.mxu0 0.0
      %1622 = vmatpush.xpose.msra.mxu0 0.0
      %1623 = vmatpush.xpose.msra.mxu0 0.0
      %1624 = vmatpush.xpose.msra.mxu0 0.0
      %1625 = vmatpush.xpose.msra.mxu0 0.0
      %1626 = vmatpush.xpose.msra.mxu0 0.0
      %1627 = vmatpush.xpose.msra.mxu0 0.0
      %1628 = vmatpush.xpose.msra.mxu0 0.0
      %1629 = vmatpush.xpose.msra.mxu0 0.0
      %1630 = vmatpush.xpose.msra.mxu0 0.0
      %1631 = vmatpush.xpose.msra.mxu0 0.0
      %1632 = vmatpush.xpose.msra.mxu0 0.0
      %v1633 = vand.u32 %v1616, 4294901760
      %1634 = vmatpush.xpose.msra.mxu0 %v1633
      %v1635 = vand.u32 %v1614, 4294901760
      %v1636 = vsub.f32 %v1614, %v1635
      %v1637 = vand.u32 %v1636, 4294901760
      %v1638 = vsub.f32 %v1636, %v1637
      %v1639 = vand.u32 %v1638, 4294901760
      %1640 = vmatmul.f32.gmra.mxu0 %v1639
      %v1641 = vpop.f32.mrf.mxu0
      %v1642 = vadd.f32 0.0, %v1641
      %1643 = vdwg.mxu0
      %1644 = vmatpush.xpose.msra.mxu0 0.0
      %1645 = vmatpush.xpose.msra.mxu0 0.0
      %1646 = vmatpush.xpose.msra.mxu0 0.0
      %1647 = vmatpush.xpose.msra.mxu0 0.0
      %1648 = vmatpush.xpose.msra.mxu0 0.0
      %1649 = vmatpush.xpose.msra.mxu0 0.0
      %1650 = vmatpush.xpose.msra.mxu0 0.0
      %1651 = vmatpush.xpose.msra.mxu0 0.0
      %1652 = vmatpush.xpose.msra.mxu0 0.0
      %1653 = vmatpush.xpose.msra.mxu0 0.0
      %1654 = vmatpush.xpose.msra.mxu0 0.0
      %1655 = vmatpush.xpose.msra.mxu0 0.0
      %1656 = vmatpush.xpose.msra.mxu0 0.0
      %1657 = vmatpush.xpose.msra.mxu0 0.0
      %1658 = vmatpush.xpose.msra.mxu0 0.0
      %v1659 = vand.u32 %v1616, 4294901760
      %v1660 = vsub.f32 %v1616, %v1659
      %v1661 = vand.u32 %v1660, 4294901760
      %v1662 = vsub.f32 %v1660, %v1661
      %v1663 = vand.u32 %v1662, 4294901760
      %1664 = vmatpush.xpose.msra.mxu0 %v1663
      %v1665 = vand.u32 %v1614, 4294901760
      %1666 = vmatmul.f32.gmra.mxu0 %v1665
      %v1667 = vpop.f32.mrf.mxu0
      %v1668 = vadd.f32 %v1642, %v1667
      %1669 = vdwg.mxu0
      %1670 = vmatpush.xpose.msra.mxu0 0.0
      %1671 = vmatpush.xpose.msra.mxu0 0.0
      %1672 = vmatpush.xpose.msra.mxu0 0.0
      %1673 = vmatpush.xpose.msra.mxu0 0.0
      %1674 = vmatpush.xpose.msra.mxu0 0.0
      %1675 = vmatpush.xpose.msra.mxu0 0.0
      %1676 = vmatpush.xpose.msra.mxu0 0.0
      %1677 = vmatpush.xpose.msra.mxu0 0.0
      %1678 = vmatpush.xpose.msra.mxu0 0.0
      %1679 = vmatpush.xpose.msra.mxu0 0.0
      %1680 = vmatpush.xpose.msra.mxu0 0.0
      %1681 = vmatpush.xpose.msra.mxu0 0.0
      %1682 = vmatpush.xpose.msra.mxu0 0.0
      %1683 = vmatpush.xpose.msra.mxu0 0.0
      %1684 = vmatpush.xpose.msra.mxu0 0.0
      %v1685 = vand.u32 %v1616, 4294901760
      %v1686 = vsub.f32 %v1616, %v1685
      %1687 = vmatpush.xpose.msra.mxu0 %v1686
      %v1688 = vand.u32 %v1614, 4294901760
      %v1689 = vsub.f32 %v1614, %v1688
      %1690 = vmatmul.f32.gmra.mxu0 %v1689
      %v1691 = vpop.f32.mrf.mxu0
      %v1692 = vadd.f32 %v1668, %v1691
      %1693 = vdwg.mxu0
      %1694 = vmatpush.xpose.msra.mxu0 0.0
      %1695 = vmatpush.xpose.msra.mxu0 0.0
      %1696 = vmatpush.xpose.msra.mxu0 0.0
      %1697 = vmatpush.xpose.msra.mxu0 0.0
      %1698 = vmatpush.xpose.msra.mxu0 0.0
      %1699 = vmatpush.xpose.msra.mxu0 0.0
      %1700 = vmatpush.xpose.msra.mxu0 0.0
      %1701 = vmatpush.xpose.msra.mxu0 0.0
      %1702 = vmatpush.xpose.msra.mxu0 0.0
      %1703 = vmatpush.xpose.msra.mxu0 0.0
      %1704 = vmatpush.xpose.msra.mxu0 0.0
      %1705 = vmatpush.xpose.msra.mxu0 0.0
      %1706 = vmatpush.xpose.msra.mxu0 0.0
      %1707 = vmatpush.xpose.msra.mxu0 0.0
      %1708 = vmatpush.xpose.msra.mxu0 0.0
      %v1709 = vand.u32 %v1616, 4294901760
      %1710 = vmatpush.xpose.msra.mxu0 %v1709
      %v1711 = vand.u32 %v1614, 4294901760
      %v1712 = vsub.f32 %v1614, %v1711
      %v1713 = vand.u32 %v1712, 4294901760
      %1714 = vmatmul.f32.gmra.mxu0 %v1713
      %v1715 = vpop.f32.mrf.mxu0
      %v1716 = vadd.f32 %v1692, %v1715
      %1717 = vdwg.mxu0
      %1718 = vmatpush.xpose.msra.mxu0 0.0
      %1719 = vmatpush.xpose.msra.mxu0 0.0
      %1720 = vmatpush.xpose.msra.mxu0 0.0
      %1721 = vmatpush.xpose.msra.mxu0 0.0
      %1722 = vmatpush.xpose.msra.mxu0 0.0
      %1723 = vmatpush.xpose.msra.mxu0 0.0
      %1724 = vmatpush.xpose.msra.mxu0 0.0
      %1725 = vmatpush.xpose.msra.mxu0 0.0
      %1726 = vmatpush.xpose.msra.mxu0 0.0
      %1727 = vmatpush.xpose.msra.mxu0 0.0
      %1728 = vmatpush.xpose.msra.mxu0 0.0
      %1729 = vmatpush.xpose.msra.mxu0 0.0
      %1730 = vmatpush.xpose.msra.mxu0 0.0
      %1731 = vmatpush.xpose.msra.mxu0 0.0
      %1732 = vmatpush.xpose.msra.mxu0 0.0
      %v1733 = vand.u32 %v1616, 4294901760
      %v1734 = vsub.f32 %v1616, %v1733
      %v1735 = vand.u32 %v1734, 4294901760
      %1736 = vmatpush.xpose.msra.mxu0 %v1735
      %v1737 = vand.u32 %v1614, 4294901760
      %1738 = vmatmul.f32.gmra.mxu0 %v1737
      %v1739 = vpop.f32.mrf.mxu0
      %v1740 = vadd.f32 %v1716, %v1739
      %1741 = vdwg.mxu0
      %1742 = vmatpush.xpose.msra.mxu0 0.0
      %1743 = vmatpush.xpose.msra.mxu0 0.0
      %1744 = vmatpush.xpose.msra.mxu0 0.0
      %1745 = vmatpush.xpose.msra.mxu0 0.0
      %1746 = vmatpush.xpose.msra.mxu0 0.0
      %1747 = vmatpush.xpose.msra.mxu0 0.0
      %1748 = vmatpush.xpose.msra.mxu0 0.0
      %1749 = vmatpush.xpose.msra.mxu0 0.0
      %1750 = vmatpush.xpose.msra.mxu0 0.0
      %1751 = vmatpush.xpose.msra.mxu0 0.0
      %1752 = vmatpush.xpose.msra.mxu0 0.0
      %1753 = vmatpush.xpose.msra.mxu0 0.0
      %1754 = vmatpush.xpose.msra.mxu0 0.0
      %1755 = vmatpush.xpose.msra.mxu0 0.0
      %1756 = vmatpush.xpose.msra.mxu0 0.0
      %v1757 = vand.u32 %v1616, 4294901760
      %1758 = vmatpush.xpose.msra.mxu0 %v1757
      %v1759 = vand.u32 %v1614, 4294901760
      %1760 = vmatmul.f32.gmra.mxu0 %v1759
      %v1761 = vpop.f32.mrf.mxu0
      %v1762 = vadd.f32 %v1740, %v1761
      %1763 = vdwg.mxu0
      %v1764 = vsel %vm624, %v1762, -inf
      %1765 = vmax.xlane.f32.xlu0 %v1764
      %v1766 = vpop.xlane.xlu0 %1765
      %v1767 = vsub.f32 %v1762, %v1766
      %v1768 = vmul.f32 %v1767, 1.442695
      %v1769 = vpow.pop %v1768
      %v1770 = vsel %vm624, %v1769, 0.0
      %1771 = vadd.xlane.f32.xlu0 %v1770
      %v1772 = vpop.xlane.xlu0 %1771
      %v1773 = vrcp.pop %v1772
      %v1774 = vmul.f32 %v1772, %v1773
      %v1775 = vsub.f32 1.0, %v1774
      %v1776 = vmul.f32 %v1773, %v1775
      %v1777 = vadd.f32 %v1773, %v1776
      %vm1778 = vweird.f32 %v1772
      %vm1779 = vweird.f32 %v1773
      %vm1780 = vmor %vm1778, %vm1779
      %v1781 = vsel %vm1780, %v1773, %v1777
      %v1782 = vand.u32 2147483647, %v1772
      %vm1783 = vcmp.eq.f32.partialorder %v1782, 8.507059e+37
      %v1784 = vand.u32 %v1772, 2147483648
      %v1785 = vor.u32 1.1754944e-38, %v1784
      %v1786 = vsel %vm1783, %v1785, %v1781
      %v1787 = vmul.f32 %v1769, %v1786
      %1788 = vrot.lane.b32.xlu0 %v619, 104
      %v1789 = vpop.permute.xlu0 %1788
      %v1792 = vsel %vm624, %v1787, 0
      %1794 = vmatpush.msra.mxu0 0.0
      %1795 = vmatpush.msra.mxu0 0.0
      %1796 = vmatpush.msra.mxu0 0.0
      %1797 = vmatpush.msra.mxu0 0.0
      %1798 = vmatpush.msra.mxu0 0.0
      %1799 = vmatpush.msra.mxu0 0.0
      %1800 = vmatpush.msra.mxu0 0.0
      %1801 = vmatpush.msra.mxu0 0.0
      %1802 = vmatpush.msra.mxu0 0.0
      %1803 = vmatpush.msra.mxu0 0.0
      %1804 = vmatpush.msra.mxu0 0.0
      %1805 = vmatpush.msra.mxu0 0.0
      %1806 = vmatpush.msra.mxu0 0.0
      %1807 = vmatpush.msra.mxu0 0.0
      %1808 = vmatpush.msra.mxu0 0.0
      %v1809 = vand.u32 %v1789, 4294901760
      %1810 = vmatpush.msra.mxu0 %v1809
      %v1811 = vand.u32 %v1792, 4294901760
      %v1812 = vsub.f32 %v1792, %v1811
      %v1813 = vand.u32 %v1812, 4294901760
      %v1814 = vsub.f32 %v1812, %v1813
      %v1815 = vand.u32 %v1814, 4294901760
      %1816 = vmatmul.f32.gmra.mxu0 %v1815
      %v1817 = vpop.f32.mrf.mxu0
      %v1818 = vadd.f32 0.0, %v1817
      %1819 = vdwg.mxu0
      %1820 = vmatpush.msra.mxu0 0.0
      %1821 = vmatpush.msra.mxu0 0.0
      %1822 = vmatpush.msra.mxu0 0.0
      %1823 = vmatpush.msra.mxu0 0.0
      %1824 = vmatpush.msra.mxu0 0.0
      %1825 = vmatpush.msra.mxu0 0.0
      %1826 = vmatpush.msra.mxu0 0.0
      %1827 = vmatpush.msra.mxu0 0.0
      %1828 = vmatpush.msra.mxu0 0.0
      %1829 = vmatpush.msra.mxu0 0.0
      %1830 = vmatpush.msra.mxu0 0.0
      %1831 = vmatpush.msra.mxu0 0.0
      %1832 = vmatpush.msra.mxu0 0.0
      %1833 = vmatpush.msra.mxu0 0.0
      %1834 = vmatpush.msra.mxu0 0.0
      %v1835 = vand.u32 %v1789, 4294901760
      %v1836 = vsub.f32 %v1789, %v1835
      %v1837 = vand.u32 %v1836, 4294901760
      %v1838 = vsub.f32 %v1836, %v1837
      %v1839 = vand.u32 %v1838, 4294901760
      %1840 = vmatpush.msra.mxu0 %v1839
      %v1841 = vand.u32 %v1792, 4294901760
      %1842 = vmatmul.f32.gmra.mxu0 %v1841
      %v1843 = vpop.f32.mrf.mxu0
      %v1844 = vadd.f32 %v1818, %v1843
      %1845 = vdwg.mxu0
      %1846 = vmatpush.msra.mxu0 0.0
      %1847 = vmatpush.msra.mxu0 0.0
      %1848 = vmatpush.msra.mxu0 0.0
      %1849 = vmatpush.msra.mxu0 0.0
      %1850 = vmatpush.msra.mxu0 0.0
      %1851 = vmatpush.msra.mxu0 0.0
      %1852 = vmatpush.msra.mxu0 0.0
      %1853 = vmatpush.msra.mxu0 0.0
      %1854 = vmatpush.msra.mxu0 0.0
      %1855 = vmatpush.msra.mxu0 0.0
      %1856 = vmatpush.msra.mxu0 0.0
      %1857 = vmatpush.msra.mxu0 0.0
      %1858 = vmatpush.msra.mxu0 0.0
      %1859 = vmatpush.msra.mxu0 0.0
      %1860 = vmatpush.msra.mxu0 0.0
      %v1861 = vand.u32 %v1789, 4294901760
      %v1862 = vsub.f32 %v1789, %v1861
      %1863 = vmatpush.msra.mxu0 %v1862
      %v1864 = vand.u32 %v1792, 4294901760
      %v1865 = vsub.f32 %v1792, %v1864
      %1866 = vmatmul.f32.gmra.mxu0 %v1865
      %v1867 = vpop.f32.mrf.mxu0
      %v1868 = vadd.f32 %v1844, %v1867
      %1869 = vdwg.mxu0
      %1870 = vmatpush.msra.mxu0 0.0
      %1871 = vmatpush.msra.mxu0 0.0
      %1872 = vmatpush.msra.mxu0 0.0
      %1873 = vmatpush.msra.mxu0 0.0
      %1874 = vmatpush.msra.mxu0 0.0
      %1875 = vmatpush.msra.mxu0 0.0
      %1876 = vmatpush.msra.mxu0 0.0
      %1877 = vmatpush.msra.mxu0 0.0
      %1878 = vmatpush.msra.mxu0 0.0
      %1879 = vmatpush.msra.mxu0 0.0
      %1880 = vmatpush.msra.mxu0 0.0
      %1881 = vmatpush.msra.mxu0 0.0
      %1882 = vmatpush.msra.mxu0 0.0
      %1883 = vmatpush.msra.mxu0 0.0
      %1884 = vmatpush.msra.mxu0 0.0
      %v1885 = vand.u32 %v1789, 4294901760
      %1886 = vmatpush.msra.mxu0 %v1885
      %v1887 = vand.u32 %v1792, 4294901760
      %v1888 = vsub.f32 %v1792, %v1887
      %v1889 = vand.u32 %v1888, 4294901760
      %1890 = vmatmul.f32.gmra.mxu0 %v1889
      %v1891 = vpop.f32.mrf.mxu0
      %v1892 = vadd.f32 %v1868, %v1891
      %1893 = vdwg.mxu0
      %1894 = vmatpush.msra.mxu0 0.0
      %1895 = vmatpush.msra.mxu0 0.0
      %1896 = vmatpush.msra.mxu0 0.0
      %1897 = vmatpush.msra.mxu0 0.0
      %1898 = vmatpush.msra.mxu0 0.0
      %1899 = vmatpush.msra.mxu0 0.0
      %1900 = vmatpush.msra.mxu0 0.0
      %1901 = vmatpush.msra.mxu0 0.0
      %1902 = vmatpush.msra.mxu0 0.0
      %1903 = vmatpush.msra.mxu0 0.0
      %1904 = vmatpush.msra.mxu0 0.0
      %1905 = vmatpush.msra.mxu0 0.0
      %1906 = vmatpush.msra.mxu0 0.0
      %1907 = vmatpush.msra.mxu0 0.0
      %1908 = vmatpush.msra.mxu0 0.0
      %v1909 = vand.u32 %v1789, 4294901760
      %v1910 = vsub.f32 %v1789, %v1909
      %v1911 = vand.u32 %v1910, 4294901760
      %1912 = vmatpush.msra.mxu0 %v1911
      %v1913 = vand.u32 %v1792, 4294901760
      %1914 = vmatmul.f32.gmra.mxu0 %v1913
      %v1915 = vpop.f32.mrf.mxu0
      %v1916 = vadd.f32 %v1892, %v1915
      %1917 = vdwg.mxu0
      %1918 = vmatpush.msra.mxu0 0.0
      %1919 = vmatpush.msra.mxu0 0.0
      %1920 = vmatpush.msra.mxu0 0.0
      %1921 = vmatpush.msra.mxu0 0.0
      %1922 = vmatpush.msra.mxu0 0.0
      %1923 = vmatpush.msra.mxu0 0.0
      %1924 = vmatpush.msra.mxu0 0.0
      %1925 = vmatpush.msra.mxu0 0.0
      %1926 = vmatpush.msra.mxu0 0.0
      %1927 = vmatpush.msra.mxu0 0.0
      %1928 = vmatpush.msra.mxu0 0.0
      %1929 = vmatpush.msra.mxu0 0.0
      %1930 = vmatpush.msra.mxu0 0.0
      %1931 = vmatpush.msra.mxu0 0.0
      %1932 = vmatpush.msra.mxu0 0.0
      %v1933 = vand.u32 %v1789, 4294901760
      %1934 = vmatpush.msra.mxu0 %v1933
      %v1935 = vand.u32 %v1792, 4294901760
      %1936 = vmatmul.f32.gmra.mxu0 %v1935
      %v1937 = vpop.f32.mrf.mxu0
      %v1938 = vadd.f32 %v1916, %v1937
      %1939 = vdwg.mxu0
      %1941 = vrot.lane.b32.xlu0 %v1278, 8
      %v1942 = vpop.permute.xlu0 %1941
      %1945 = vrot.lane.b32.xlu0 %v1608, 16
      %v1946 = vpop.permute.xlu0 %1945
      %1949 = vrot.lane.b32.xlu0 %v1938, 24
      %v1950 = vpop.permute.xlu0 %1949
      %v1952 = vsel %vm624, %v947, %v1942
      %vm1953 = vcmask 130048
      %v1954 = vsel %vm1953, %v1952, %v1946
      %vm1955 = vcmask 195584
      %v1956 = vsel %vm1955, %v1954, %v1950
      %v1957 = vperm.slane %v217, 3
      %1958 = vrot.lane.b32.xlu0 %v213, 32
      %v1959 = vpop.permute.xlu0 %1958
      %1960 = vrot.lane.b32.xlu0 %v214, 32
      %v1961 = vpop.permute.xlu0 %1960
      %1962 = vrot.lane.b32.xlu0 %v215, 32
      %v1963 = vpop.permute.xlu0 %1962
      %1964 = vrot.lane.b32.xlu0 %v216, 32
      %v1965 = vpop.permute.xlu0 %1964
      %v1971 = vsel %vm218, %v1956, 0
      %1973 = vmatpush.msra.mxu0 0.0
      %1974 = vmatpush.msra.mxu0 0.0
      %1975 = vmatpush.msra.mxu0 0.0
      %1976 = vmatpush.msra.mxu0 0.0
      %1977 = vmatpush.msra.mxu0 0.0
      %1978 = vmatpush.msra.mxu0 0.0
      %1979 = vmatpush.msra.mxu0 0.0
      %1980 = vmatpush.msra.mxu0 0.0
      %1981 = vmatpush.msra.mxu0 0.0
      %1982 = vmatpush.msra.mxu0 0.0
      %1983 = vmatpush.msra.mxu0 0.0
      %1984 = vmatpush.msra.mxu0 0.0
      %v1985 = vand.u32 %v1965, 4294901760
      %1986 = vmatpush.msra.mxu0 %v1985
      %v1987 = vand.u32 %v1963, 4294901760
      %1988 = vmatpush.msra.mxu0 %v1987
      %v1989 = vand.u32 %v1961, 4294901760
      %1990 = vmatpush.msra.mxu0 %v1989
      %v1991 = vand.u32 %v1959, 4294901760
      %1992 = vmatpush.msra.mxu0 %v1991
      %v1993 = vand.u32 %v1971, 4294901760
      %v1994 = vsub.f32 %v1971, %v1993
      %v1995 = vand.u32 %v1994, 4294901760
      %v1996 = vsub.f32 %v1994, %v1995
      %v1997 = vand.u32 %v1996, 4294901760
      %1998 = vmatmul.f32.gmra.mxu0 %v1997
      %v1999 = vpop.f32.mrf.mxu0
      %v2000 = vadd.f32 %v1957, %v1999
      %2001 = vdwg.mxu0
      %2002 = vmatpush.msra.mxu0 0.0
      %2003 = vmatpush.msra.mxu0 0.0
      %2004 = vmatpush.msra.mxu0 0.0
      %2005 = vmatpush.msra.mxu0 0.0
      %2006 = vmatpush.msra.mxu0 0.0
      %2007 = vmatpush.msra.mxu0 0.0
      %2008 = vmatpush.msra.mxu0 0.0
      %2009 = vmatpush.msra.mxu0 0.0
      %2010 = vmatpush.msra.mxu0 0.0
      %2011 = vmatpush.msra.mxu0 0.0
      %2012 = vmatpush.msra.mxu0 0.0
      %2013 = vmatpush.msra.mxu0 0.0
      %v2014 = vand.u32 %v1965, 4294901760
      %v2015 = vsub.f32 %v1965, %v2014
      %v2016 = vand.u32 %v2015, 4294901760
      %v2017 = vsub.f32 %v2015, %v2016
      %v2018 = vand.u32 %v2017, 4294901760
      %2019 = vmatpush.msra.mxu0 %v2018
      %v2020 = vand.u32 %v1963, 4294901760
      %v2021 = vsub.f32 %v1963, %v2020
      %v2022 = vand.u32 %v2021, 4294901760
      %v2023 = vsub.f32 %v2021, %v2022
      %v2024 = vand.u32 %v2023, 4294901760
      %2025 = vmatpush.msra.mxu0 %v2024
      %v2026 = vand.u32 %v1961, 4294901760
      %v2027 = vsub.f32 %v1961, %v2026
      %v2028 = vand.u32 %v2027, 4294901760
      %v2029 = vsub.f32 %v2027, %v2028
      %v2030 = vand.u32 %v2029, 4294901760
      %2031 = vmatpush.msra.mxu0 %v2030
      %v2032 = vand.u32 %v1959, 4294901760
      %v2033 = vsub.f32 %v1959, %v2032
      %v2034 = vand.u32 %v2033, 4294901760
      %v2035 = vsub.f32 %v2033, %v2034
      %v2036 = vand.u32 %v2035, 4294901760
      %2037 = vmatpush.msra.mxu0 %v2036
      %v2038 = vand.u32 %v1971, 4294901760
      %2039 = vmatmul.f32.gmra.mxu0 %v2038
      %v2040 = vpop.f32.mrf.mxu0
      %v2041 = vadd.f32 %v2000, %v2040
      %2042 = vdwg.mxu0
      %2043 = vmatpush.msra.mxu0 0.0
      %2044 = vmatpush.msra.mxu0 0.0
      %2045 = vmatpush.msra.mxu0 0.0
      %2046 = vmatpush.msra.mxu0 0.0
      %2047 = vmatpush.msra.mxu0 0.0
      %2048 = vmatpush.msra.mxu0 0.0
      %2049 = vmatpush.msra.mxu0 0.0
      %2050 = vmatpush.msra.mxu0 0.0
      %2051 = vmatpush.msra.mxu0 0.0
      %2052 = vmatpush.msra.mxu0 0.0
      %2053 = vmatpush.msra.mxu0 0.0
      %2054 = vmatpush.msra.mxu0 0.0
      %v2055 = vand.u32 %v1965, 4294901760
      %v2056 = vsub.f32 %v1965, %v2055
      %2057 = vmatpush.msra.mxu0 %v2056
      %v2058 = vand.u32 %v1963, 4294901760
      %v2059 = vsub.f32 %v1963, %v2058
      %2060 = vmatpush.msra.mxu0 %v2059
      %v2061 = vand.u32 %v1961, 4294901760
      %v2062 = vsub.f32 %v1961, %v2061
      %2063 = vmatpush.msra.mxu0 %v2062
      %v2064 = vand.u32 %v1959, 4294901760
      %v2065 = vsub.f32 %v1959, %v2064
      %2066 = vmatpush.msra.mxu0 %v2065
      %v2067 = vand.u32 %v1971, 4294901760
      %v2068 = vsub.f32 %v1971, %v2067
      %2069 = vmatmul.f32.gmra.mxu0 %v2068
      %v2070 = vpop.f32.mrf.mxu0
      %v2071 = vadd.f32 %v2041, %v2070
      %2072 = vdwg.mxu0
      %2073 = vmatpush.msra.mxu0 0.0
      %2074 = vmatpush.msra.mxu0 0.0
      %2075 = vmatpush.msra.mxu0 0.0
      %2076 = vmatpush.msra.mxu0 0.0
      %2077 = vmatpush.msra.mxu0 0.0
      %2078 = vmatpush.msra.mxu0 0.0
      %2079 = vmatpush.msra.mxu0 0.0
      %2080 = vmatpush.msra.mxu0 0.0
      %2081 = vmatpush.msra.mxu0 0.0
      %2082 = vmatpush.msra.mxu0 0.0
      %2083 = vmatpush.msra.mxu0 0.0
      %2084 = vmatpush.msra.mxu0 0.0
      %v2085 = vand.u32 %v1965, 4294901760
      %2086 = vmatpush.msra.mxu0 %v2085
      %v2087 = vand.u32 %v1963, 4294901760
      %2088 = vmatpush.msra.mxu0 %v2087
      %v2089 = vand.u32 %v1961, 4294901760
      %2090 = vmatpush.msra.mxu0 %v2089
      %v2091 = vand.u32 %v1959, 4294901760
      %2092 = vmatpush.msra.mxu0 %v2091
      %v2093 = vand.u32 %v1971, 4294901760
      %v2094 = vsub.f32 %v1971, %v2093
      %v2095 = vand.u32 %v2094, 4294901760
      %2096 = vmatmul.f32.gmra.mxu0 %v2095
      %v2097 = vpop.f32.mrf.mxu0
      %v2098 = vadd.f32 %v2071, %v2097
      %2099 = vdwg.mxu0
      %2100 = vmatpush.msra.mxu0 0.0
      %2101 = vmatpush.msra.mxu0 0.0
      %2102 = vmatpush.msra.mxu0 0.0
      %2103 = vmatpush.msra.mxu0 0.0
      %2104 = vmatpush.msra.mxu0 0.0
      %2105 = vmatpush.msra.mxu0 0.0
      %2106 = vmatpush.msra.mxu0 0.0
      %2107 = vmatpush.msra.mxu0 0.0
      %2108 = vmatpush.msra.mxu0 0.0
      %2109 = vmatpush.msra.mxu0 0.0
      %2110 = vmatpush.msra.mxu0 0.0
      %2111 = vmatpush.msra.mxu0 0.0
      %v2112 = vand.u32 %v1965, 4294901760
      %v2113 = vsub.f32 %v1965, %v2112
      %v2114 = vand.u32 %v2113, 4294901760
      %2115 = vmatpush.msra.mxu0 %v2114
      %v2116 = vand.u32 %v1963, 4294901760
      %v2117 = vsub.f32 %v1963, %v2116
      %v2118 = vand.u32 %v2117, 4294901760
      %2119 = vmatpush.msra.mxu0 %v2118
      %v2120 = vand.u32 %v1961, 4294901760
      %v2121 = vsub.f32 %v1961, %v2120
      %v2122 = vand.u32 %v2121, 4294901760
      %2123 = vmatpush.msra.mxu0 %v2122
      %v2124 = vand.u32 %v1959, 4294901760
      %v2125 = vsub.f32 %v1959, %v2124
      %v2126 = vand.u32 %v2125, 4294901760
      %2127 = vmatpush.msra.mxu0 %v2126
      %v2128 = vand.u32 %v1971, 4294901760
      %2129 = vmatmul.f32.gmra.mxu0 %v2128
      %v2130 = vpop.f32.mrf.mxu0
      %v2131 = vadd.f32 %v2098, %v2130
      %2132 = vdwg.mxu0
      %2133 = vmatpush.msra.mxu0 0.0
      %2134 = vmatpush.msra.mxu0 0.0
      %2135 = vmatpush.msra.mxu0 0.0
      %2136 = vmatpush.msra.mxu0 0.0
      %2137 = vmatpush.msra.mxu0 0.0
      %2138 = vmatpush.msra.mxu0 0.0
      %2139 = vmatpush.msra.mxu0 0.0
      %2140 = vmatpush.msra.mxu0 0.0
      %2141 = vmatpush.msra.mxu0 0.0
      %2142 = vmatpush.msra.mxu0 0.0
      %2143 = vmatpush.msra.mxu0 0.0
      %2144 = vmatpush.msra.mxu0 0.0
      %v2145 = vand.u32 %v1965, 4294901760
      %2146 = vmatpush.msra.mxu0 %v2145
      %v2147 = vand.u32 %v1963, 4294901760
      %2148 = vmatpush.msra.mxu0 %v2147
      %v2149 = vand.u32 %v1961, 4294901760
      %2150 = vmatpush.msra.mxu0 %v2149
      %v2151 = vand.u32 %v1959, 4294901760
      %2152 = vmatpush.msra.mxu0 %v2151
      %v2153 = vand.u32 %v1971, 4294901760
      %2154 = vmatmul.f32.gmra.mxu0 %v2153
      %v2155 = vpop.f32.mrf.mxu0
      %v2156 = vadd.f32 %v2131, %v2155
      %2157 = vdwg.mxu0
      %v2158 = vadd.f32 %v210, %v2156
      %v2159 = vsel %vm218, %v2158, 0.0
      %2160 = vadd.xlane.f32.xlu0 %v2159
      %v2161 = vpop.xlane.xlu0 %2160
      %v2162 = vrcp.pop 32.0
      %v2163 = vmul.f32 32.0, %v2162
      %v2164 = vsub.f32 1.0, %v2163
      %v2165 = vmul.f32 %v2162, %v2164
      %v2166 = vadd.f32 %v2162, %v2165
      %vm2167 = vweird.f32 %v2162
      %v2168 = vsel %vm2167, %v2162, %v2166
      %v2169 = vmul.f32 %v2161, %v2168
      %v2170 = vsub.f32 %v2158, %v2169
      %v2171 = vmul.f32 %v2170, %v2170
      %v2172 = vsel %vm218, %v2171, 0.0
      %2173 = vadd.xlane.f32.xlu0 %v2172
      %v2174 = vpop.xlane.xlu0 %2173
      %v2175 = vmul.f32 %v2174, %v2168
      %v2176 = vadd.f32 %v2175, 1e-05
      %v2177 = vrsqrt.pop %v2176
      %v2178 = vmul.f32 %v2177, %v2176
      %v2179 = vmul.f32 %v2178, %v2177
      %v2180 = vmul.f32 0.5, %v2179
      %v2181 = vsub.f32 1.5, %v2180
      %v2182 = vmul.f32 %v2177, %v2181
      %vm2183 = vweird.f32 %v2176
      %vm2184 = vweird.f32 %v2177
      %vm2185 = vmor %vm2183, %vm2184
      %v2186 = vsel %vm2185, %v2177, %v2182
      %v2187 = vmul.f32 %v2170, %v2186
      %v2188 = vperm.slane %v217, 4
      %v2189 = vmul.f32 %v2187, %v2188
      %v2190 = vperm.slane %v217, 5
      %v2191 = vadd.f32 %v2189, %v2190
      %2192 = vst.msk [vmem:[%s209] sm:$0xff] %vm218, %v2191
      %p2193 = scmp.lt.s32.totalorder %s15, 1
      %s2194 = scalar_select %p2193, %s15, 1
      %s2195 = smul.addr %s2194, 8
      %s2196 = scalar_lea.vmem %s4, %s2195
      // Predicated region
      $region37: #{self_attention_layer.1} parent=35 // pred_check
        %p2197 = pneg %p127
      $region38: #{self_attention_layer.1} parent=35 // pred_check_branch
        %2199 = sbr.rel (%p2197) target = $region40
      $region39: #{self_attention_layer.1} parent=35 // pred_region
        _
      $region40: #{self_attention_layer.1} parent=35 // pred_fallthru
        _
    $region36: #{self_attention_layer.1} parent=5 // pred_fallthru
      _
    %p2200 = scmp.le.s32.totalorder 2, %s10
    // Predicated region
    $region41: #{self_attention_layer.1} parent=5 // pred_check
      %p2201 = pneg %p2200
    $region42: #{self_attention_layer.1} parent=5 // pred_check_branch
      %2203 = sbr.rel (%p2201) target = $region44
    $region43: #{self_attention_layer.1} parent=5 // pred_region
      %s2204 = ssub.s32 %s10, 2
      // Predicated region
      $region45: #{self_attention_layer.1} parent=43 // pred_check
        %p2205 = pneg %p133
      $region46: #{self_attention_layer.1} parent=43 // pred_check_branch
        %2207 = sbr.rel (%p2205) target = $region48
      $region47: #{self_attention_layer.1} parent=43 // pred_region
        %p2208 = scmp.lt.s32.totalorder %s16, 1
        %s2209 = scalar_select %p2208, %s16, 1
        %s2210 = smul.addr %s2209, 8
        %s2211 = scalar_lea.vmem %s4, %s2210
      $region48: #{self_attention_layer.1} parent=43 // pred_fallthru
        _
    $region44: #{self_attention_layer.1} parent=5 // pred_fallthru
      _
  $region6: #{self_attention_layer.1} parent=0 // loop_footer
    %s14 = sadd.s32 1, %s10
  $region7: #{self_attention_layer.1} parent=0 // loop_footer_branch
    %9 = sbr.rel target = $region3
  $region8: #{self_attention_layer.1} parent=0 // loop_exit
    _

</llo_original>
